<compile_context>
chip_gen: v7x
topology: tpu7x:2x2x1
jax: 0.10.0
libtpu: 0.0.40
codegen_flags: <defaults>
</compile_context>

<pallas_src>
import functools

import numpy as np
import jax
import jax.numpy as jnp
from jax.experimental import pallas as pl
from jax.experimental.pallas import tpu as pltpu


def _round_up(x, m):
    return (x + m - 1) // m * m


def _tap_masks(H, W, ksize):
    """(K*K, H*W) float32 validity masks for 'same' zero padding."""
    pad = ksize // 2
    hh, ww = np.meshgrid(np.arange(H), np.arange(W), indexing="ij")
    masks = []
    for ky in range(ksize):
        for kx in range(ksize):
            oy, ox = ky - pad, kx - pad
            valid = ((hh + oy >= 0) & (hh + oy < H) &
                     (ww + ox >= 0) & (ww + ox < W))
            masks.append(valid.reshape(-1).astype(np.float32))
    return jnp.asarray(np.stack(masks, axis=0))


def _seresblock_kernel(x_ref, mask_ref, w1_ref, b1_ref, w2_ref, b2_ref,
                       sw1_ref, sb1_ref, sw2_ref, sb2_ref,
                       out_ref, pad_ref, slab_ref,
                       *, ksize: int, H: int, W: int, margin: int):
    nb, C, HW = x_ref.shape
    pad = ksize // 2
    K2 = ksize * ksize
    seg = 2 * margin + HW                     # per-image padded segment length
    offs = [(ky - pad) * W + (kx - pad) for ky in range(ksize) for kx in range(ksize)]

    # Hoist the (small) tap masks once; they are reused for both convs.
    masks = [mask_ref[t:t + 1, :] for t in range(K2)]

    # Zero only the halo margins of the flat line buffer (tiny; the interior is
    # fully overwritten before every read).
    zero_m = jnp.zeros((C, margin), jnp.float32)
    for b in range(nb):
        base = b * seg
        pad_ref[:, base:base + margin] = zero_m
        pad_ref[:, base + margin + HW:base + seg] = zero_m

    def build_slab():
        # im2col: 9 statically shifted + masked taps per image -> one
        # (9*C, nb*HW) bf16 slab (columns are image-major, pixel-minor).
        for b in range(nb):
            base = b * seg
            for t, s in enumerate(offs):
                tap = pad_ref[:, base + margin + s: base + margin + s + HW] * masks[t]
                slab_ref[t * C:(t + 1) * C, b * HW:(b + 1) * HW] = tap.astype(jnp.bfloat16)

    x_imgs = [x_ref[b] for b in range(nb)]                          # (C, HW) f32 each

    # --- conv1 + ReLU: one MXU matmul over the whole batch ---
    for b in range(nb):
        pad_ref[:, b * seg + margin: b * seg + margin + HW] = x_imgs[b]
    build_slab()
    h1 = jnp.maximum(
        jnp.dot(w1_ref[...], slab_ref[...], preferred_element_type=jnp.float32)
        + b1_ref[...], 0.0)                                         # (C, nb*HW) f32

    # --- conv2: one MXU matmul over the whole batch ---
    for b in range(nb):
        pad_ref[:, b * seg + margin: b * seg + margin + HW] = h1[:, b * HW:(b + 1) * HW]
    build_slab()
    r = jnp.dot(w2_ref[...], slab_ref[...], preferred_element_type=jnp.float32) \
        + b2_ref[...]                                               # (C, nb*HW) f32

    # --- SE layer + residual, per image, on VPU/XLU/EUP (no M=1 MXU matmuls) ---
    inv_hw = 1.0 / HW
    for b in range(nb):
        rb = r[:, b * HW:(b + 1) * HW]                              # (C, HW)
        pooled = jnp.sum(rb, axis=1, keepdims=True) * inv_hw        # (C, 1)
        z = jnp.maximum(
            jnp.sum(sw1_ref[...] * pooled, axis=0, keepdims=True)
            + sb1_ref[...], 0.0)                                    # (1, Cr)
        gate = jax.nn.sigmoid(
            jnp.sum(sw2_ref[...] * z, axis=1, keepdims=True)
            + sb2_ref[...])                                         # (C, 1)
        out_ref[b] = rb * gate + x_imgs[b]                          # residual add


def seresblock_forward(x_nchw, params, ksize):
    """x_nchw: (N, C, H, W) float32, PyTorch layout.  Returns (N, C, H, W) f32."""
    N, C, H, W = x_nchw.shape
    HW = H * W
    K2 = ksize * ksize
    pad = ksize // 2
    Cr = params["se_w1"].shape[0]               # PyTorch Conv2d(C, Cr, 1): (Cr, C)

    # Free reshape (contiguous) -- no HBM transpose; H*W lands on the lane axis.
    x = x_nchw.reshape(N, C, HW).astype(jnp.float32)

    # Conv weights (Cout, Cin, kh, kw) -> (Cout, kh*kw*Cin) bf16, im2col order.
    def pack_w(w):
        return jnp.transpose(w, (0, 2, 3, 1)).reshape(C, K2 * C).astype(jnp.bfloat16)

    w1 = pack_w(params["w1"])
    w2 = pack_w(params["w2"])
    b1 = params["b1"].reshape(C, 1).astype(jnp.float32)
    b2 = params["b2"].reshape(C, 1).astype(jnp.float32)
    sw1t = jnp.transpose(params["se_w1"]).astype(jnp.float32)       # (C, Cr)
    sb1 = params["se_b1"].reshape(1, Cr).astype(jnp.float32)
    sw2 = params["se_w2"].astype(jnp.float32)                       # (C, Cr)
    sb2 = params["se_b2"].reshape(C, 1).astype(jnp.float32)

    masks = _tap_masks(H, W, ksize)                                 # (K2, HW) f32

    # Flat line buffer: per image [margin | image (H*W) | margin]; margin is a
    # multiple of 128 so every interior store is lane-aligned, and >= pad*(W+1)
    # so every shifted tap read stays in-bounds.
    margin = _round_up(pad * (W + 1), 128)
    seg = 2 * margin + HW

    # Merge the (small) batch into one grid step (~0.35us per-step overhead) and
    # one MXU matmul per conv.
    # TODO(synk): for large N / H / W, shrink `nb` and add spatial (H) tiling
    # with a `pad`-row halo so blocks fit v7x's 64 MiB VMEM and both TCs work.
    nb = N
    assert N % nb == 0
    grid = (N // nb,)

    kern = functools.partial(_seresblock_kernel, ksize=ksize, H=H, W=W,
                             margin=margin)
    out = pl.pallas_call(
        kern,
        out_shape=jax.ShapeDtypeStruct((N, C, HW), jnp.float32),
        grid_spec=pltpu.PrefetchScalarGridSpec(
            num_scalar_prefetch=0,
            grid=grid,
            in_specs=[
                pl.BlockSpec((nb, C, HW), lambda i: (i, 0, 0)),     # x
                pl.BlockSpec((K2, HW), lambda i: (0, 0)),           # tap masks
                pl.BlockSpec((C, K2 * C), lambda i: (0, 0)),        # w1 (bf16)
                pl.BlockSpec((C, 1), lambda i: (0, 0)),             # b1
                pl.BlockSpec((C, K2 * C), lambda i: (0, 0)),        # w2 (bf16)
                pl.BlockSpec((C, 1), lambda i: (0, 0)),             # b2
                pl.BlockSpec((C, Cr), lambda i: (0, 0)),            # se_w1^T
                pl.BlockSpec((1, Cr), lambda i: (0, 0)),            # se_b1
                pl.BlockSpec((C, Cr), lambda i: (0, 0)),            # se_w2
                pl.BlockSpec((C, 1), lambda i: (0, 0)),             # se_b2
            ],
            out_specs=pl.BlockSpec((nb, C, HW), lambda i: (i, 0, 0)),
            scratch_shapes=[
                pltpu.VMEM((C, nb * seg), jnp.float32),             # line buffer
                pltpu.VMEM((K2 * C, nb * HW), jnp.bfloat16),        # im2col slab
            ],
        ),
        compiler_params=pltpu.CompilerParams(
            dimension_semantics=("parallel",)),
    )(x, masks, w1, b1, w2, b2, sw1t, sb1, sw2, sb2)
    return out.reshape(N, C, H, W)


def _reference(x_nchw, params, ksize, conv_dtype=jnp.float32):
    """Pure-JAX reference mirroring the PyTorch forward.

    conv_dtype=bfloat16 reproduces the kernel's bf16-operand / f32-accumulate
    conv matmuls for a tight numerical check.
    """
    pad = ksize // 2
    C = x_nchw.shape[1]

    def conv(x, w, b):
        y = jax.lax.conv_general_dilated(
            x.astype(conv_dtype), w.astype(conv_dtype),
            window_strides=(1, 1), padding=[(pad, pad), (pad, pad)],
            dimension_numbers=("NCHW", "OIHW", "NCHW"),
            preferred_element_type=jnp.float32)
        return y + b.reshape(1, C, 1, 1).astype(jnp.float32)

    r = jnp.maximum(conv(x_nchw, params["w1"], params["b1"]), 0.0)
    r = conv(r, params["w2"], params["b2"])
    pooled = jnp.mean(r, axis=(2, 3))                                    # (N, C)
    z = jnp.maximum(pooled @ params["se_w1"].T + params["se_b1"], 0.0)   # (N, Cr)
    g = jax.nn.sigmoid(z @ params["se_w2"].T + params["se_b2"])          # (N, C)
    return r * g[:, :, None, None] + x_nchw


if __name__ == "__main__":
    N, C, H, W = 2, 16, 16, 16
    ksize = 3
    reduction = 4
    Cr = C // reduction

    key = jax.random.PRNGKey(0)
    k = jax.random.split(key, 9)

    params = {
        # PyTorch-native layouts.
        "w1":    jax.random.normal(k[0], (C, C, ksize, ksize), jnp.float32) * 0.1,
        "b1":    jax.random.normal(k[1], (C,), jnp.float32) * 0.1,
        "w2":    jax.random.normal(k[2], (C, C, ksize, ksize), jnp.float32) * 0.1,
        "b2":    jax.random.normal(k[3], (C,), jnp.float32) * 0.1,
        "se_w1": jax.random.normal(k[4], (Cr, C), jnp.float32) * 0.1,
        "se_b1": jax.random.normal(k[5], (Cr,), jnp.float32) * 0.1,
        "se_w2": jax.random.normal(k[6], (C, Cr), jnp.float32) * 0.1,
        "se_b2": jax.random.normal(k[7], (C,), jnp.float32) * 0.1,
    }
    x = jax.random.normal(k[8], (N, C, H, W), jnp.float32)

    out = seresblock_forward(x, params, ksize)
    out = jax.block_until_ready(out)
    assert out.shape == (N, C, H, W)

    # Tight check vs a reference using the same bf16-operand / f32-accumulate
    # conv matmuls as the kernel (verifies the kernel algorithm itself).
    ref_bf16 = _reference(x, params, ksize, conv_dtype=jnp.bfloat16)
    err_bf16 = float(jnp.max(jnp.abs(out - ref_bf16)))
    assert err_bf16 < 2e-3, err_bf16

    # Loose check vs the exact f32 PyTorch-equivalent forward (difference is the
    # expected bf16 operand rounding in the two 3x3 convs).
    ref_f32 = _reference(x, params, ksize, conv_dtype=jnp.float32)
    err_f32 = float(jnp.max(jnp.abs(out - ref_f32)))
    assert err_f32 < 5e-2, err_f32

    print("KERNEL_OK")
</pallas_src>

<mosaic_0001>
module attributes {stable_mosaic.version = 11 : i64} {
  func.func @_seresblock_kernel(%arg0: i32, %arg1: memref<2x16x256xf32, #tpu.memory_space<vmem>>, %arg2: memref<9x256xf32, #tpu.memory_space<vmem>>, %arg3: memref<16x144xbf16, #tpu.memory_space<vmem>>, %arg4: memref<16x1xf32, #tpu.memory_space<vmem>>, %arg5: memref<16x144xbf16, #tpu.memory_space<vmem>>, %arg6: memref<16x1xf32, #tpu.memory_space<vmem>>, %arg7: memref<16x4xf32, #tpu.memory_space<vmem>>, %arg8: memref<1x4xf32, #tpu.memory_space<vmem>>, %arg9: memref<16x4xf32, #tpu.memory_space<vmem>>, %arg10: memref<16x1xf32, #tpu.memory_space<vmem>>, %arg11: memref<2x16x256xf32, #tpu.memory_space<vmem>>, %arg12: memref<16x1024xf32, #tpu.memory_space<vmem>>, %arg13: memref<144x512xbf16, #tpu.memory_space<vmem>>) attributes {dimension_semantics = [#tpu.dimension_semantics<parallel>], iteration_bounds = array<i64: 1>, scalar_prefetch = 0 : i64, scratch_operands = 2 : i64, tpu.core_type = #tpu.core_type<tc>, window_params = [{transform_indices = @transform_0, window_bounds = array<i64: 2, 16, 256>}, {pipeline_mode = #tpu.pipeline_mode<synchronous>, transform_indices = @transform_1, window_bounds = array<i64: 9, 256>}, {pipeline_mode = #tpu.pipeline_mode<synchronous>, transform_indices = @transform_2, window_bounds = array<i64: 16, 144>}, {pipeline_mode = #tpu.pipeline_mode<synchronous>, transform_indices = @transform_3, window_bounds = array<i64: 16, 1>}, {pipeline_mode = #tpu.pipeline_mode<synchronous>, transform_indices = @transform_4, window_bounds = array<i64: 16, 144>}, {pipeline_mode = #tpu.pipeline_mode<synchronous>, transform_indices = @transform_5, window_bounds = array<i64: 16, 1>}, {pipeline_mode = #tpu.pipeline_mode<synchronous>, transform_indices = @transform_6, window_bounds = array<i64: 16, 4>}, {pipeline_mode = #tpu.pipeline_mode<synchronous>, transform_indices = @transform_7, window_bounds = array<i64: 1, 4>}, {pipeline_mode = #tpu.pipeline_mode<synchronous>, transform_indices = @transform_8, window_bounds = array<i64: 16, 4>}, {pipeline_mode = #tpu.pipeline_mode<synchronous>, transform_indices = @transform_9, window_bounds = array<i64: 16, 1>}, {transform_indices = @transform_10, window_bounds = array<i64: 2, 16, 256>}]} {
    %c0 = arith.constant 0 : index
    %c0_0 = arith.constant 0 : index
    %0 = vector.load %arg2[%c0, %c0_0] : memref<9x256xf32, #tpu.memory_space<vmem>>, vector<1x256xf32>
    %c1 = arith.constant 1 : index
    %c0_1 = arith.constant 0 : index
    %1 = vector.load %arg2[%c1, %c0_1] : memref<9x256xf32, #tpu.memory_space<vmem>>, vector<1x256xf32>
    %c2 = arith.constant 2 : index
    %c0_2 = arith.constant 0 : index
    %2 = vector.load %arg2[%c2, %c0_2] : memref<9x256xf32, #tpu.memory_space<vmem>>, vector<1x256xf32>
    %c3 = arith.constant 3 : index
    %c0_3 = arith.constant 0 : index
    %3 = vector.load %arg2[%c3, %c0_3] : memref<9x256xf32, #tpu.memory_space<vmem>>, vector<1x256xf32>
    %c4 = arith.constant 4 : index
    %c0_4 = arith.constant 0 : index
    %4 = vector.load %arg2[%c4, %c0_4] : memref<9x256xf32, #tpu.memory_space<vmem>>, vector<1x256xf32>
    %c5 = arith.constant 5 : index
    %c0_5 = arith.constant 0 : index
    %5 = vector.load %arg2[%c5, %c0_5] : memref<9x256xf32, #tpu.memory_space<vmem>>, vector<1x256xf32>
    %c6 = arith.constant 6 : index
    %c0_6 = arith.constant 0 : index
    %6 = vector.load %arg2[%c6, %c0_6] : memref<9x256xf32, #tpu.memory_space<vmem>>, vector<1x256xf32>
    %c7 = arith.constant 7 : index
    %c0_7 = arith.constant 0 : index
    %7 = vector.load %arg2[%c7, %c0_7] : memref<9x256xf32, #tpu.memory_space<vmem>>, vector<1x256xf32>
    %c8 = arith.constant 8 : index
    %c0_8 = arith.constant 0 : index
    %8 = vector.load %arg2[%c8, %c0_8] : memref<9x256xf32, #tpu.memory_space<vmem>>, vector<1x256xf32>
    %cst = arith.constant 0.000000e+00 : f32
    %9 = vector.broadcast %cst : f32 to vector<16x128xf32>
    %c0_9 = arith.constant 0 : index
    %c0_10 = arith.constant 0 : index
    %10 = vector.load %arg12[%c0_9, %c0_10] : memref<16x1024xf32, #tpu.memory_space<vmem>>, vector<16x128xf32>
    tpu.vector_store %arg12[%c0_9, %c0_10], %9 {strides = array<i32>} : memref<16x1024xf32, #tpu.memory_space<vmem>>, vector<16x128xf32>,
    %c0_11 = arith.constant 0 : index
    %c384 = arith.constant 384 : index
    %11 = vector.load %arg12[%c0_11, %c384] : memref<16x1024xf32, #tpu.memory_space<vmem>>, vector<16x128xf32>
    tpu.vector_store %arg12[%c0_11, %c384], %9 {strides = array<i32>} : memref<16x1024xf32, #tpu.memory_space<vmem>>, vector<16x128xf32>,
    %c0_12 = arith.constant 0 : index
    %c512 = arith.constant 512 : index
    %12 = vector.load %arg12[%c0_12, %c512] : memref<16x1024xf32, #tpu.memory_space<vmem>>, vector<16x128xf32>
    tpu.vector_store %arg12[%c0_12, %c512], %9 {strides = array<i32>} : memref<16x1024xf32, #tpu.memory_space<vmem>>, vector<16x128xf32>,
    %c0_13 = arith.constant 0 : index
    %c896 = arith.constant 896 : index
    %13 = vector.load %arg12[%c0_13, %c896] : memref<16x1024xf32, #tpu.memory_space<vmem>>, vector<16x128xf32>
    tpu.vector_store %arg12[%c0_13, %c896], %9 {strides = array<i32>} : memref<16x1024xf32, #tpu.memory_space<vmem>>, vector<16x128xf32>,
    %c0_14 = arith.constant 0 : index
    %c0_15 = arith.constant 0 : index
    %c0_16 = arith.constant 0 : index
    %14 = vector.load %arg1[%c0_14, %c0_15, %c0_16] : memref<2x16x256xf32, #tpu.memory_space<vmem>>, vector<1x16x256xf32>
    %15 = vector.shape_cast %14 : vector<1x16x256xf32> to vector<16x256xf32>
    %c1_17 = arith.constant 1 : index
    %c0_18 = arith.constant 0 : index
    %c0_19 = arith.constant 0 : index
    %16 = vector.load %arg1[%c1_17, %c0_18, %c0_19] : memref<2x16x256xf32, #tpu.memory_space<vmem>>, vector<1x16x256xf32>
    %17 = vector.shape_cast %16 : vector<1x16x256xf32> to vector<16x256xf32>
    %c0_20 = arith.constant 0 : index
    %c128 = arith.constant 128 : index
    %18 = vector.load %arg12[%c0_20, %c128] : memref<16x1024xf32, #tpu.memory_space<vmem>>, vector<16x256xf32>
    tpu.vector_store %arg12[%c0_20, %c128], %15 {strides = array<i32>} : memref<16x1024xf32, #tpu.memory_space<vmem>>, vector<16x256xf32>,
    %c0_21 = arith.constant 0 : index
    %c640 = arith.constant 640 : index
    %19 = vector.load %arg12[%c0_21, %c640] : memref<16x1024xf32, #tpu.memory_space<vmem>>, vector<16x256xf32>
    tpu.vector_store %arg12[%c0_21, %c640], %17 {strides = array<i32>} : memref<16x1024xf32, #tpu.memory_space<vmem>>, vector<16x256xf32>,
    %c0_22 = arith.constant 0 : index
    %c111 = arith.constant 111 : index
    %20 = vector.load %arg12[%c0_22, %c111] : memref<16x1024xf32, #tpu.memory_space<vmem>>, vector<16x256xf32>
    %21 = vector.broadcast %0 : vector<1x256xf32> to vector<16x256xf32>
    %22 = arith.mulf %20, %21 : vector<16x256xf32>
    %23 = arith.truncf %22 : vector<16x256xf32> to vector<16x256xbf16>
    %c0_23 = arith.constant 0 : index
    %c0_24 = arith.constant 0 : index
    %24 = vector.load %arg13[%c0_23, %c0_24] : memref<144x512xbf16, #tpu.memory_space<vmem>>, vector<16x256xbf16>
    tpu.vector_store %arg13[%c0_23, %c0_24], %23 {strides = array<i32>} : memref<144x512xbf16, #tpu.memory_space<vmem>>, vector<16x256xbf16>,
    %c0_25 = arith.constant 0 : index
    %c112 = arith.constant 112 : index
    %25 = vector.load %arg12[%c0_25, %c112] : memref<16x1024xf32, #tpu.memory_space<vmem>>, vector<16x256xf32>
    %26 = vector.broadcast %1 : vector<1x256xf32> to vector<16x256xf32>
    %27 = arith.mulf %25, %26 : vector<16x256xf32>
    %28 = arith.truncf %27 : vector<16x256xf32> to vector<16x256xbf16>
    %c16 = arith.constant 16 : index
    %c0_26 = arith.constant 0 : index
    %29 = vector.load %arg13[%c16, %c0_26] : memref<144x512xbf16, #tpu.memory_space<vmem>>, vector<16x256xbf16>
    tpu.vector_store %arg13[%c16, %c0_26], %28 {strides = array<i32>} : memref<144x512xbf16, #tpu.memory_space<vmem>>, vector<16x256xbf16>,
    %c0_27 = arith.constant 0 : index
    %c113 = arith.constant 113 : index
    %30 = vector.load %arg12[%c0_27, %c113] : memref<16x1024xf32, #tpu.memory_space<vmem>>, vector<16x256xf32>
    %31 = vector.broadcast %2 : vector<1x256xf32> to vector<16x256xf32>
    %32 = arith.mulf %30, %31 : vector<16x256xf32>
    %33 = arith.truncf %32 : vector<16x256xf32> to vector<16x256xbf16>
    %c32 = arith.constant 32 : index
    %c0_28 = arith.constant 0 : index
    %34 = vector.load %arg13[%c32, %c0_28] : memref<144x512xbf16, #tpu.memory_space<vmem>>, vector<16x256xbf16>
    tpu.vector_store %arg13[%c32, %c0_28], %33 {strides = array<i32>} : memref<144x512xbf16, #tpu.memory_space<vmem>>, vector<16x256xbf16>,
    %c0_29 = arith.constant 0 : index
    %c127 = arith.constant 127 : index
    %35 = vector.load %arg12[%c0_29, %c127] : memref<16x1024xf32, #tpu.memory_space<vmem>>, vector<16x256xf32>
    %36 = vector.broadcast %3 : vector<1x256xf32> to vector<16x256xf32>
    %37 = arith.mulf %35, %36 : vector<16x256xf32>
    %38 = arith.truncf %37 : vector<16x256xf32> to vector<16x256xbf16>
    %c48 = arith.constant 48 : index
    %c0_30 = arith.constant 0 : index
    %39 = vector.load %arg13[%c48, %c0_30] : memref<144x512xbf16, #tpu.memory_space<vmem>>, vector<16x256xbf16>
    tpu.vector_store %arg13[%c48, %c0_30], %38 {strides = array<i32>} : memref<144x512xbf16, #tpu.memory_space<vmem>>, vector<16x256xbf16>,
    %c0_31 = arith.constant 0 : index
    %c128_32 = arith.constant 128 : index
    %40 = vector.load %arg12[%c0_31, %c128_32] : memref<16x1024xf32, #tpu.memory_space<vmem>>, vector<16x256xf32>
    %41 = vector.broadcast %4 : vector<1x256xf32> to vector<16x256xf32>
    %42 = arith.mulf %40, %41 : vector<16x256xf32>
    %43 = arith.truncf %42 : vector<16x256xf32> to vector<16x256xbf16>
    %c64 = arith.constant 64 : index
    %c0_33 = arith.constant 0 : index
    %44 = vector.load %arg13[%c64, %c0_33] : memref<144x512xbf16, #tpu.memory_space<vmem>>, vector<16x256xbf16>
    tpu.vector_store %arg13[%c64, %c0_33], %43 {strides = array<i32>} : memref<144x512xbf16, #tpu.memory_space<vmem>>, vector<16x256xbf16>,
    %c0_34 = arith.constant 0 : index
    %c129 = arith.constant 129 : index
    %45 = vector.load %arg12[%c0_34, %c129] : memref<16x1024xf32, #tpu.memory_space<vmem>>, vector<16x256xf32>
    %46 = vector.broadcast %5 : vector<1x256xf32> to vector<16x256xf32>
    %47 = arith.mulf %45, %46 : vector<16x256xf32>
    %48 = arith.truncf %47 : vector<16x256xf32> to vector<16x256xbf16>
    %c80 = arith.constant 80 : index
    %c0_35 = arith.constant 0 : index
    %49 = vector.load %arg13[%c80, %c0_35] : memref<144x512xbf16, #tpu.memory_space<vmem>>, vector<16x256xbf16>
    tpu.vector_store %arg13[%c80, %c0_35], %48 {strides = array<i32>} : memref<144x512xbf16, #tpu.memory_space<vmem>>, vector<16x256xbf16>,
    %c0_36 = arith.constant 0 : index
    %c143 = arith.constant 143 : index
    %50 = vector.load %arg12[%c0_36, %c143] : memref<16x1024xf32, #tpu.memory_space<vmem>>, vector<16x256xf32>
    %51 = vector.broadcast %6 : vector<1x256xf32> to vector<16x256xf32>
    %52 = arith.mulf %50, %51 : vector<16x256xf32>
    %53 = arith.truncf %52 : vector<16x256xf32> to vector<16x256xbf16>
    %c96 = arith.constant 96 : index
    %c0_37 = arith.constant 0 : index
    %54 = vector.load %arg13[%c96, %c0_37] : memref<144x512xbf16, #tpu.memory_space<vmem>>, vector<16x256xbf16>
    tpu.vector_store %arg13[%c96, %c0_37], %53 {strides = array<i32>} : memref<144x512xbf16, #tpu.memory_space<vmem>>, vector<16x256xbf16>,
    %c0_38 = arith.constant 0 : index
    %c144 = arith.constant 144 : index
    %55 = vector.load %arg12[%c0_38, %c144] : memref<16x1024xf32, #tpu.memory_space<vmem>>, vector<16x256xf32>
    %56 = vector.broadcast %7 : vector<1x256xf32> to vector<16x256xf32>
    %57 = arith.mulf %55, %56 : vector<16x256xf32>
    %58 = arith.truncf %57 : vector<16x256xf32> to vector<16x256xbf16>
    %c112_39 = arith.constant 112 : index
    %c0_40 = arith.constant 0 : index
    %59 = vector.load %arg13[%c112_39, %c0_40] : memref<144x512xbf16, #tpu.memory_space<vmem>>, vector<16x256xbf16>
    tpu.vector_store %arg13[%c112_39, %c0_40], %58 {strides = array<i32>} : memref<144x512xbf16, #tpu.memory_space<vmem>>, vector<16x256xbf16>,
    %c0_41 = arith.constant 0 : index
    %c145 = arith.constant 145 : index
    %60 = vector.load %arg12[%c0_41, %c145] : memref<16x1024xf32, #tpu.memory_space<vmem>>, vector<16x256xf32>
    %61 = vector.broadcast %8 : vector<1x256xf32> to vector<16x256xf32>
    %62 = arith.mulf %60, %61 : vector<16x256xf32>
    %63 = arith.truncf %62 : vector<16x256xf32> to vector<16x256xbf16>
    %c128_42 = arith.constant 128 : index
    %c0_43 = arith.constant 0 : index
    %64 = vector.load %arg13[%c128_42, %c0_43] : memref<144x512xbf16, #tpu.memory_space<vmem>>, vector<16x256xbf16>
    tpu.vector_store %arg13[%c128_42, %c0_43], %63 {strides = array<i32>} : memref<144x512xbf16, #tpu.memory_space<vmem>>, vector<16x256xbf16>,
    %c0_44 = arith.constant 0 : index
    %c623 = arith.constant 623 : index
    %65 = vector.load %arg12[%c0_44, %c623] : memref<16x1024xf32, #tpu.memory_space<vmem>>, vector<16x256xf32>
    %66 = vector.broadcast %0 : vector<1x256xf32> to vector<16x256xf32>
    %67 = arith.mulf %65, %66 : vector<16x256xf32>
    %68 = arith.truncf %67 : vector<16x256xf32> to vector<16x256xbf16>
    %c0_45 = arith.constant 0 : index
    %c256 = arith.constant 256 : index
    %69 = vector.load %arg13[%c0_45, %c256] : memref<144x512xbf16, #tpu.memory_space<vmem>>, vector<16x256xbf16>
    tpu.vector_store %arg13[%c0_45, %c256], %68 {strides = array<i32>} : memref<144x512xbf16, #tpu.memory_space<vmem>>, vector<16x256xbf16>,
    %c0_46 = arith.constant 0 : index
    %c624 = arith.constant 624 : index
    %70 = vector.load %arg12[%c0_46, %c624] : memref<16x1024xf32, #tpu.memory_space<vmem>>, vector<16x256xf32>
    %71 = vector.broadcast %1 : vector<1x256xf32> to vector<16x256xf32>
    %72 = arith.mulf %70, %71 : vector<16x256xf32>
    %73 = arith.truncf %72 : vector<16x256xf32> to vector<16x256xbf16>
    %c16_47 = arith.constant 16 : index
    %c256_48 = arith.constant 256 : index
    %74 = vector.load %arg13[%c16_47, %c256_48] : memref<144x512xbf16, #tpu.memory_space<vmem>>, vector<16x256xbf16>
    tpu.vector_store %arg13[%c16_47, %c256_48], %73 {strides = array<i32>} : memref<144x512xbf16, #tpu.memory_space<vmem>>, vector<16x256xbf16>,
    %c0_49 = arith.constant 0 : index
    %c625 = arith.constant 625 : index
    %75 = vector.load %arg12[%c0_49, %c625] : memref<16x1024xf32, #tpu.memory_space<vmem>>, vector<16x256xf32>
    %76 = vector.broadcast %2 : vector<1x256xf32> to vector<16x256xf32>
    %77 = arith.mulf %75, %76 : vector<16x256xf32>
    %78 = arith.truncf %77 : vector<16x256xf32> to vector<16x256xbf16>
    %c32_50 = arith.constant 32 : index
    %c256_51 = arith.constant 256 : index
    %79 = vector.load %arg13[%c32_50, %c256_51] : memref<144x512xbf16, #tpu.memory_space<vmem>>, vector<16x256xbf16>
    tpu.vector_store %arg13[%c32_50, %c256_51], %78 {strides = array<i32>} : memref<144x512xbf16, #tpu.memory_space<vmem>>, vector<16x256xbf16>,
    %c0_52 = arith.constant 0 : index
    %c639 = arith.constant 639 : index
    %80 = vector.load %arg12[%c0_52, %c639] : memref<16x1024xf32, #tpu.memory_space<vmem>>, vector<16x256xf32>
    %81 = vector.broadcast %3 : vector<1x256xf32> to vector<16x256xf32>
    %82 = arith.mulf %80, %81 : vector<16x256xf32>
    %83 = arith.truncf %82 : vector<16x256xf32> to vector<16x256xbf16>
    %c48_53 = arith.constant 48 : index
    %c256_54 = arith.constant 256 : index
    %84 = vector.load %arg13[%c48_53, %c256_54] : memref<144x512xbf16, #tpu.memory_space<vmem>>, vector<16x256xbf16>
    tpu.vector_store %arg13[%c48_53, %c256_54], %83 {strides = array<i32>} : memref<144x512xbf16, #tpu.memory_space<vmem>>, vector<16x256xbf16>,
    %c0_55 = arith.constant 0 : index
    %c640_56 = arith.constant 640 : index
    %85 = vector.load %arg12[%c0_55, %c640_56] : memref<16x1024xf32, #tpu.memory_space<vmem>>, vector<16x256xf32>
    %86 = vector.broadcast %4 : vector<1x256xf32> to vector<16x256xf32>
    %87 = arith.mulf %85, %86 : vector<16x256xf32>
    %88 = arith.truncf %87 : vector<16x256xf32> to vector<16x256xbf16>
    %c64_57 = arith.constant 64 : index
    %c256_58 = arith.constant 256 : index
    %89 = vector.load %arg13[%c64_57, %c256_58] : memref<144x512xbf16, #tpu.memory_space<vmem>>, vector<16x256xbf16>
    tpu.vector_store %arg13[%c64_57, %c256_58], %88 {strides = array<i32>} : memref<144x512xbf16, #tpu.memory_space<vmem>>, vector<16x256xbf16>,
    %c0_59 = arith.constant 0 : index
    %c641 = arith.constant 641 : index
    %90 = vector.load %arg12[%c0_59, %c641] : memref<16x1024xf32, #tpu.memory_space<vmem>>, vector<16x256xf32>
    %91 = vector.broadcast %5 : vector<1x256xf32> to vector<16x256xf32>
    %92 = arith.mulf %90, %91 : vector<16x256xf32>
    %93 = arith.truncf %92 : vector<16x256xf32> to vector<16x256xbf16>
    %c80_60 = arith.constant 80 : index
    %c256_61 = arith.constant 256 : index
    %94 = vector.load %arg13[%c80_60, %c256_61] : memref<144x512xbf16, #tpu.memory_space<vmem>>, vector<16x256xbf16>
    tpu.vector_store %arg13[%c80_60, %c256_61], %93 {strides = array<i32>} : memref<144x512xbf16, #tpu.memory_space<vmem>>, vector<16x256xbf16>,
    %c0_62 = arith.constant 0 : index
    %c655 = arith.constant 655 : index
    %95 = vector.load %arg12[%c0_62, %c655] : memref<16x1024xf32, #tpu.memory_space<vmem>>, vector<16x256xf32>
    %96 = vector.broadcast %6 : vector<1x256xf32> to vector<16x256xf32>
    %97 = arith.mulf %95, %96 : vector<16x256xf32>
    %98 = arith.truncf %97 : vector<16x256xf32> to vector<16x256xbf16>
    %c96_63 = arith.constant 96 : index
    %c256_64 = arith.constant 256 : index
    %99 = vector.load %arg13[%c96_63, %c256_64] : memref<144x512xbf16, #tpu.memory_space<vmem>>, vector<16x256xbf16>
    tpu.vector_store %arg13[%c96_63, %c256_64], %98 {strides = array<i32>} : memref<144x512xbf16, #tpu.memory_space<vmem>>, vector<16x256xbf16>,
    %c0_65 = arith.constant 0 : index
    %c656 = arith.constant 656 : index
    %100 = vector.load %arg12[%c0_65, %c656] : memref<16x1024xf32, #tpu.memory_space<vmem>>, vector<16x256xf32>
    %101 = vector.broadcast %7 : vector<1x256xf32> to vector<16x256xf32>
    %102 = arith.mulf %100, %101 : vector<16x256xf32>
    %103 = arith.truncf %102 : vector<16x256xf32> to vector<16x256xbf16>
    %c112_66 = arith.constant 112 : index
    %c256_67 = arith.constant 256 : index
    %104 = vector.load %arg13[%c112_66, %c256_67] : memref<144x512xbf16, #tpu.memory_space<vmem>>, vector<16x256xbf16>
    tpu.vector_store %arg13[%c112_66, %c256_67], %103 {strides = array<i32>} : memref<144x512xbf16, #tpu.memory_space<vmem>>, vector<16x256xbf16>,
    %c0_68 = arith.constant 0 : index
    %c657 = arith.constant 657 : index
    %105 = vector.load %arg12[%c0_68, %c657] : memref<16x1024xf32, #tpu.memory_space<vmem>>, vector<16x256xf32>
    %106 = vector.broadcast %8 : vector<1x256xf32> to vector<16x256xf32>
    %107 = arith.mulf %105, %106 : vector<16x256xf32>
    %108 = arith.truncf %107 : vector<16x256xf32> to vector<16x256xbf16>
    %c128_69 = arith.constant 128 : index
    %c256_70 = arith.constant 256 : index
    %109 = vector.load %arg13[%c128_69, %c256_70] : memref<144x512xbf16, #tpu.memory_space<vmem>>, vector<16x256xbf16>
    tpu.vector_store %arg13[%c128_69, %c256_70], %108 {strides = array<i32>} : memref<144x512xbf16, #tpu.memory_space<vmem>>, vector<16x256xbf16>,
    %c0_71 = arith.constant 0 : index
    %c0_72 = arith.constant 0 : index
    %110 = vector.load %arg3[%c0_71, %c0_72] : memref<16x144xbf16, #tpu.memory_space<vmem>>, vector<16x144xbf16>
    %c0_73 = arith.constant 0 : index
    %c0_74 = arith.constant 0 : index
    %111 = vector.load %arg13[%c0_73, %c0_74] : memref<144x512xbf16, #tpu.memory_space<vmem>>, vector<144x512xbf16>
    %cst_75 = arith.constant dense<0.000000e+00> : vector<16x512xf32>
    %112 = tpu.matmul %110, %111, %cst_75 {dimension_numbers = #tpu.dot_dimension_numbers<[1], [0], [0], [1], [0, 0, 1, 1], [], []>} : vector<16x144xbf16>, vector<144x512xbf16>, vector<16x512xf32> -> vector<16x512xf32>
    %c0_76 = arith.constant 0 : index
    %c0_77 = arith.constant 0 : index
    %113 = vector.load %arg4[%c0_76, %c0_77] : memref<16x1xf32, #tpu.memory_space<vmem>>, vector<16x1xf32>
    %114 = vector.broadcast %113 : vector<16x1xf32> to vector<16x512xf32>
    %115 = arith.addf %112, %114 : vector<16x512xf32>
    %cst_78 = arith.constant 0.000000e+00 : f32
    %116 = vector.broadcast %cst_78 : f32 to vector<16x512xf32>
    %117 = arith.maximumf %115, %116 : vector<16x512xf32>
    %118 = vector.extract_strided_slice %117 {offsets = [0, 0], sizes = [16, 256], strides = [1, 1]} : vector<16x512xf32> to vector<16x256xf32>
    %c0_79 = arith.constant 0 : index
    %c128_80 = arith.constant 128 : index
    %119 = vector.load %arg12[%c0_79, %c128_80] : memref<16x1024xf32, #tpu.memory_space<vmem>>, vector<16x256xf32>
    tpu.vector_store %arg12[%c0_79, %c128_80], %118 {strides = array<i32>} : memref<16x1024xf32, #tpu.memory_space<vmem>>, vector<16x256xf32>,
    %120 = vector.extract_strided_slice %117 {offsets = [0, 256], sizes = [16, 256], strides = [1, 1]} : vector<16x512xf32> to vector<16x256xf32>
    %c0_81 = arith.constant 0 : index
    %c640_82 = arith.constant 640 : index
    %121 = vector.load %arg12[%c0_81, %c640_82] : memref<16x1024xf32, #tpu.memory_space<vmem>>, vector<16x256xf32>
    tpu.vector_store %arg12[%c0_81, %c640_82], %120 {strides = array<i32>} : memref<16x1024xf32, #tpu.memory_space<vmem>>, vector<16x256xf32>,
    %c0_83 = arith.constant 0 : index
    %c111_84 = arith.constant 111 : index
    %122 = vector.load %arg12[%c0_83, %c111_84] : memref<16x1024xf32, #tpu.memory_space<vmem>>, vector<16x256xf32>
    %123 = vector.broadcast %0 : vector<1x256xf32> to vector<16x256xf32>
    %124 = arith.mulf %122, %123 : vector<16x256xf32>
    %125 = arith.truncf %124 : vector<16x256xf32> to vector<16x256xbf16>
    %c0_85 = arith.constant 0 : index
    %c0_86 = arith.constant 0 : index
    %126 = vector.load %arg13[%c0_85, %c0_86] : memref<144x512xbf16, #tpu.memory_space<vmem>>, vector<16x256xbf16>
    tpu.vector_store %arg13[%c0_85, %c0_86], %125 {strides = array<i32>} : memref<144x512xbf16, #tpu.memory_space<vmem>>, vector<16x256xbf16>,
    %c0_87 = arith.constant 0 : index
    %c112_88 = arith.constant 112 : index
    %127 = vector.load %arg12[%c0_87, %c112_88] : memref<16x1024xf32, #tpu.memory_space<vmem>>, vector<16x256xf32>
    %128 = vector.broadcast %1 : vector<1x256xf32> to vector<16x256xf32>
    %129 = arith.mulf %127, %128 : vector<16x256xf32>
    %130 = arith.truncf %129 : vector<16x256xf32> to vector<16x256xbf16>
    %c16_89 = arith.constant 16 : index
    %c0_90 = arith.constant 0 : index
    %131 = vector.load %arg13[%c16_89, %c0_90] : memref<144x512xbf16, #tpu.memory_space<vmem>>, vector<16x256xbf16>
    tpu.vector_store %arg13[%c16_89, %c0_90], %130 {strides = array<i32>} : memref<144x512xbf16, #tpu.memory_space<vmem>>, vector<16x256xbf16>,
    %c0_91 = arith.constant 0 : index
    %c113_92 = arith.constant 113 : index
    %132 = vector.load %arg12[%c0_91, %c113_92] : memref<16x1024xf32, #tpu.memory_space<vmem>>, vector<16x256xf32>
    %133 = vector.broadcast %2 : vector<1x256xf32> to vector<16x256xf32>
    %134 = arith.mulf %132, %133 : vector<16x256xf32>
    %135 = arith.truncf %134 : vector<16x256xf32> to vector<16x256xbf16>
    %c32_93 = arith.constant 32 : index
    %c0_94 = arith.constant 0 : index
    %136 = vector.load %arg13[%c32_93, %c0_94] : memref<144x512xbf16, #tpu.memory_space<vmem>>, vector<16x256xbf16>
    tpu.vector_store %arg13[%c32_93, %c0_94], %135 {strides = array<i32>} : memref<144x512xbf16, #tpu.memory_space<vmem>>, vector<16x256xbf16>,
    %c0_95 = arith.constant 0 : index
    %c127_96 = arith.constant 127 : index
    %137 = vector.load %arg12[%c0_95, %c127_96] : memref<16x1024xf32, #tpu.memory_space<vmem>>, vector<16x256xf32>
    %138 = vector.broadcast %3 : vector<1x256xf32> to vector<16x256xf32>
    %139 = arith.mulf %137, %138 : vector<16x256xf32>
    %140 = arith.truncf %139 : vector<16x256xf32> to vector<16x256xbf16>
    %c48_97 = arith.constant 48 : index
    %c0_98 = arith.constant 0 : index
    %141 = vector.load %arg13[%c48_97, %c0_98] : memref<144x512xbf16, #tpu.memory_space<vmem>>, vector<16x256xbf16>
    tpu.vector_store %arg13[%c48_97, %c0_98], %140 {strides = array<i32>} : memref<144x512xbf16, #tpu.memory_space<vmem>>, vector<16x256xbf16>,
    %c0_99 = arith.constant 0 : index
    %c128_100 = arith.constant 128 : index
    %142 = vector.load %arg12[%c0_99, %c128_100] : memref<16x1024xf32, #tpu.memory_space<vmem>>, vector<16x256xf32>
    %143 = vector.broadcast %4 : vector<1x256xf32> to vector<16x256xf32>
    %144 = arith.mulf %142, %143 : vector<16x256xf32>
    %145 = arith.truncf %144 : vector<16x256xf32> to vector<16x256xbf16>
    %c64_101 = arith.constant 64 : index
    %c0_102 = arith.constant 0 : index
    %146 = vector.load %arg13[%c64_101, %c0_102] : memref<144x512xbf16, #tpu.memory_space<vmem>>, vector<16x256xbf16>
    tpu.vector_store %arg13[%c64_101, %c0_102], %145 {strides = array<i32>} : memref<144x512xbf16, #tpu.memory_space<vmem>>, vector<16x256xbf16>,
    %c0_103 = arith.constant 0 : index
    %c129_104 = arith.constant 129 : index
    %147 = vector.load %arg12[%c0_103, %c129_104] : memref<16x1024xf32, #tpu.memory_space<vmem>>, vector<16x256xf32>
    %148 = vector.broadcast %5 : vector<1x256xf32> to vector<16x256xf32>
    %149 = arith.mulf %147, %148 : vector<16x256xf32>
    %150 = arith.truncf %149 : vector<16x256xf32> to vector<16x256xbf16>
    %c80_105 = arith.constant 80 : index
    %c0_106 = arith.constant 0 : index
    %151 = vector.load %arg13[%c80_105, %c0_106] : memref<144x512xbf16, #tpu.memory_space<vmem>>, vector<16x256xbf16>
    tpu.vector_store %arg13[%c80_105, %c0_106], %150 {strides = array<i32>} : memref<144x512xbf16, #tpu.memory_space<vmem>>, vector<16x256xbf16>,
    %c0_107 = arith.constant 0 : index
    %c143_108 = arith.constant 143 : index
    %152 = vector.load %arg12[%c0_107, %c143_108] : memref<16x1024xf32, #tpu.memory_space<vmem>>, vector<16x256xf32>
    %153 = vector.broadcast %6 : vector<1x256xf32> to vector<16x256xf32>
    %154 = arith.mulf %152, %153 : vector<16x256xf32>
    %155 = arith.truncf %154 : vector<16x256xf32> to vector<16x256xbf16>
    %c96_109 = arith.constant 96 : index
    %c0_110 = arith.constant 0 : index
    %156 = vector.load %arg13[%c96_109, %c0_110] : memref<144x512xbf16, #tpu.memory_space<vmem>>, vector<16x256xbf16>
    tpu.vector_store %arg13[%c96_109, %c0_110], %155 {strides = array<i32>} : memref<144x512xbf16, #tpu.memory_space<vmem>>, vector<16x256xbf16>,
    %c0_111 = arith.constant 0 : index
    %c144_112 = arith.constant 144 : index
    %157 = vector.load %arg12[%c0_111, %c144_112] : memref<16x1024xf32, #tpu.memory_space<vmem>>, vector<16x256xf32>
    %158 = vector.broadcast %7 : vector<1x256xf32> to vector<16x256xf32>
    %159 = arith.mulf %157, %158 : vector<16x256xf32>
    %160 = arith.truncf %159 : vector<16x256xf32> to vector<16x256xbf16>
    %c112_113 = arith.constant 112 : index
    %c0_114 = arith.constant 0 : index
    %161 = vector.load %arg13[%c112_113, %c0_114] : memref<144x512xbf16, #tpu.memory_space<vmem>>, vector<16x256xbf16>
    tpu.vector_store %arg13[%c112_113, %c0_114], %160 {strides = array<i32>} : memref<144x512xbf16, #tpu.memory_space<vmem>>, vector<16x256xbf16>,
    %c0_115 = arith.constant 0 : index
    %c145_116 = arith.constant 145 : index
    %162 = vector.load %arg12[%c0_115, %c145_116] : memref<16x1024xf32, #tpu.memory_space<vmem>>, vector<16x256xf32>
    %163 = vector.broadcast %8 : vector<1x256xf32> to vector<16x256xf32>
    %164 = arith.mulf %162, %163 : vector<16x256xf32>
    %165 = arith.truncf %164 : vector<16x256xf32> to vector<16x256xbf16>
    %c128_117 = arith.constant 128 : index
    %c0_118 = arith.constant 0 : index
    %166 = vector.load %arg13[%c128_117, %c0_118] : memref<144x512xbf16, #tpu.memory_space<vmem>>, vector<16x256xbf16>
    tpu.vector_store %arg13[%c128_117, %c0_118], %165 {strides = array<i32>} : memref<144x512xbf16, #tpu.memory_space<vmem>>, vector<16x256xbf16>,
    %c0_119 = arith.constant 0 : index
    %c623_120 = arith.constant 623 : index
    %167 = vector.load %arg12[%c0_119, %c623_120] : memref<16x1024xf32, #tpu.memory_space<vmem>>, vector<16x256xf32>
    %168 = vector.broadcast %0 : vector<1x256xf32> to vector<16x256xf32>
    %169 = arith.mulf %167, %168 : vector<16x256xf32>
    %170 = arith.truncf %169 : vector<16x256xf32> to vector<16x256xbf16>
    %c0_121 = arith.constant 0 : index
    %c256_122 = arith.constant 256 : index
    %171 = vector.load %arg13[%c0_121, %c256_122] : memref<144x512xbf16, #tpu.memory_space<vmem>>, vector<16x256xbf16>
    tpu.vector_store %arg13[%c0_121, %c256_122], %170 {strides = array<i32>} : memref<144x512xbf16, #tpu.memory_space<vmem>>, vector<16x256xbf16>,
    %c0_123 = arith.constant 0 : index
    %c624_124 = arith.constant 624 : index
    %172 = vector.load %arg12[%c0_123, %c624_124] : memref<16x1024xf32, #tpu.memory_space<vmem>>, vector<16x256xf32>
    %173 = vector.broadcast %1 : vector<1x256xf32> to vector<16x256xf32>
    %174 = arith.mulf %172, %173 : vector<16x256xf32>
    %175 = arith.truncf %174 : vector<16x256xf32> to vector<16x256xbf16>
    %c16_125 = arith.constant 16 : index
    %c256_126 = arith.constant 256 : index
    %176 = vector.load %arg13[%c16_125, %c256_126] : memref<144x512xbf16, #tpu.memory_space<vmem>>, vector<16x256xbf16>
    tpu.vector_store %arg13[%c16_125, %c256_126], %175 {strides = array<i32>} : memref<144x512xbf16, #tpu.memory_space<vmem>>, vector<16x256xbf16>,
    %c0_127 = arith.constant 0 : index
    %c625_128 = arith.constant 625 : index
    %177 = vector.load %arg12[%c0_127, %c625_128] : memref<16x1024xf32, #tpu.memory_space<vmem>>, vector<16x256xf32>
    %178 = vector.broadcast %2 : vector<1x256xf32> to vector<16x256xf32>
    %179 = arith.mulf %177, %178 : vector<16x256xf32>
    %180 = arith.truncf %179 : vector<16x256xf32> to vector<16x256xbf16>
    %c32_129 = arith.constant 32 : index
    %c256_130 = arith.constant 256 : index
    %181 = vector.load %arg13[%c32_129, %c256_130] : memref<144x512xbf16, #tpu.memory_space<vmem>>, vector<16x256xbf16>
    tpu.vector_store %arg13[%c32_129, %c256_130], %180 {strides = array<i32>} : memref<144x512xbf16, #tpu.memory_space<vmem>>, vector<16x256xbf16>,
    %c0_131 = arith.constant 0 : index
    %c639_132 = arith.constant 639 : index
    %182 = vector.load %arg12[%c0_131, %c639_132] : memref<16x1024xf32, #tpu.memory_space<vmem>>, vector<16x256xf32>
    %183 = vector.broadcast %3 : vector<1x256xf32> to vector<16x256xf32>
    %184 = arith.mulf %182, %183 : vector<16x256xf32>
    %185 = arith.truncf %184 : vector<16x256xf32> to vector<16x256xbf16>
    %c48_133 = arith.constant 48 : index
    %c256_134 = arith.constant 256 : index
    %186 = vector.load %arg13[%c48_133, %c256_134] : memref<144x512xbf16, #tpu.memory_space<vmem>>, vector<16x256xbf16>
    tpu.vector_store %arg13[%c48_133, %c256_134], %185 {strides = array<i32>} : memref<144x512xbf16, #tpu.memory_space<vmem>>, vector<16x256xbf16>,
    %c0_135 = arith.constant 0 : index
    %c640_136 = arith.constant 640 : index
    %187 = vector.load %arg12[%c0_135, %c640_136] : memref<16x1024xf32, #tpu.memory_space<vmem>>, vector<16x256xf32>
    %188 = vector.broadcast %4 : vector<1x256xf32> to vector<16x256xf32>
    %189 = arith.mulf %187, %188 : vector<16x256xf32>
    %190 = arith.truncf %189 : vector<16x256xf32> to vector<16x256xbf16>
    %c64_137 = arith.constant 64 : index
    %c256_138 = arith.constant 256 : index
    %191 = vector.load %arg13[%c64_137, %c256_138] : memref<144x512xbf16, #tpu.memory_space<vmem>>, vector<16x256xbf16>
    tpu.vector_store %arg13[%c64_137, %c256_138], %190 {strides = array<i32>} : memref<144x512xbf16, #tpu.memory_space<vmem>>, vector<16x256xbf16>,
    %c0_139 = arith.constant 0 : index
    %c641_140 = arith.constant 641 : index
    %192 = vector.load %arg12[%c0_139, %c641_140] : memref<16x1024xf32, #tpu.memory_space<vmem>>, vector<16x256xf32>
    %193 = vector.broadcast %5 : vector<1x256xf32> to vector<16x256xf32>
    %194 = arith.mulf %192, %193 : vector<16x256xf32>
    %195 = arith.truncf %194 : vector<16x256xf32> to vector<16x256xbf16>
    %c80_141 = arith.constant 80 : index
    %c256_142 = arith.constant 256 : index
    %196 = vector.load %arg13[%c80_141, %c256_142] : memref<144x512xbf16, #tpu.memory_space<vmem>>, vector<16x256xbf16>
    tpu.vector_store %arg13[%c80_141, %c256_142], %195 {strides = array<i32>} : memref<144x512xbf16, #tpu.memory_space<vmem>>, vector<16x256xbf16>,
    %c0_143 = arith.constant 0 : index
    %c655_144 = arith.constant 655 : index
    %197 = vector.load %arg12[%c0_143, %c655_144] : memref<16x1024xf32, #tpu.memory_space<vmem>>, vector<16x256xf32>
    %198 = vector.broadcast %6 : vector<1x256xf32> to vector<16x256xf32>
    %199 = arith.mulf %197, %198 : vector<16x256xf32>
    %200 = arith.truncf %199 : vector<16x256xf32> to vector<16x256xbf16>
    %c96_145 = arith.constant 96 : index
    %c256_146 = arith.constant 256 : index
    %201 = vector.load %arg13[%c96_145, %c256_146] : memref<144x512xbf16, #tpu.memory_space<vmem>>, vector<16x256xbf16>
    tpu.vector_store %arg13[%c96_145, %c256_146], %200 {strides = array<i32>} : memref<144x512xbf16, #tpu.memory_space<vmem>>, vector<16x256xbf16>,
    %c0_147 = arith.constant 0 : index
    %c656_148 = arith.constant 656 : index
    %202 = vector.load %arg12[%c0_147, %c656_148] : memref<16x1024xf32, #tpu.memory_space<vmem>>, vector<16x256xf32>
    %203 = vector.broadcast %7 : vector<1x256xf32> to vector<16x256xf32>
    %204 = arith.mulf %202, %203 : vector<16x256xf32>
    %205 = arith.truncf %204 : vector<16x256xf32> to vector<16x256xbf16>
    %c112_149 = arith.constant 112 : index
    %c256_150 = arith.constant 256 : index
    %206 = vector.load %arg13[%c112_149, %c256_150] : memref<144x512xbf16, #tpu.memory_space<vmem>>, vector<16x256xbf16>
    tpu.vector_store %arg13[%c112_149, %c256_150], %205 {strides = array<i32>} : memref<144x512xbf16, #tpu.memory_space<vmem>>, vector<16x256xbf16>,
    %c0_151 = arith.constant 0 : index
    %c657_152 = arith.constant 657 : index
    %207 = vector.load %arg12[%c0_151, %c657_152] : memref<16x1024xf32, #tpu.memory_space<vmem>>, vector<16x256xf32>
    %208 = vector.broadcast %8 : vector<1x256xf32> to vector<16x256xf32>
    %209 = arith.mulf %207, %208 : vector<16x256xf32>
    %210 = arith.truncf %209 : vector<16x256xf32> to vector<16x256xbf16>
    %c128_153 = arith.constant 128 : index
    %c256_154 = arith.constant 256 : index
    %211 = vector.load %arg13[%c128_153, %c256_154] : memref<144x512xbf16, #tpu.memory_space<vmem>>, vector<16x256xbf16>
    tpu.vector_store %arg13[%c128_153, %c256_154], %210 {strides = array<i32>} : memref<144x512xbf16, #tpu.memory_space<vmem>>, vector<16x256xbf16>,
    %c0_155 = arith.constant 0 : index
    %c0_156 = arith.constant 0 : index
    %212 = vector.load %arg5[%c0_155, %c0_156] : memref<16x144xbf16, #tpu.memory_space<vmem>>, vector<16x144xbf16>
    %c0_157 = arith.constant 0 : index
    %c0_158 = arith.constant 0 : index
    %213 = vector.load %arg13[%c0_157, %c0_158] : memref<144x512xbf16, #tpu.memory_space<vmem>>, vector<144x512xbf16>
    %cst_159 = arith.constant dense<0.000000e+00> : vector<16x512xf32>
    %214 = tpu.matmul %212, %213, %cst_159 {dimension_numbers = #tpu.dot_dimension_numbers<[1], [0], [0], [1], [0, 0, 1, 1], [], []>} : vector<16x144xbf16>, vector<144x512xbf16>, vector<16x512xf32> -> vector<16x512xf32>
    %c0_160 = arith.constant 0 : index
    %c0_161 = arith.constant 0 : index
    %215 = vector.load %arg6[%c0_160, %c0_161] : memref<16x1xf32, #tpu.memory_space<vmem>>, vector<16x1xf32>
    %216 = vector.broadcast %215 : vector<16x1xf32> to vector<16x512xf32>
    %217 = arith.addf %214, %216 : vector<16x512xf32>
    %218 = vector.extract_strided_slice %217 {offsets = [0, 0], sizes = [16, 256], strides = [1, 1]} : vector<16x512xf32> to vector<16x256xf32>
    %cst_162 = arith.constant dense<0.000000e+00> : vector<16xf32>
    %219 = vector.multi_reduction <add>, %218, %cst_162 [1] : vector<16x256xf32> to vector<16xf32>
    %220 = vector.shape_cast %219 : vector<16xf32> to vector<16x1xf32>
    %cst_163 = arith.constant 3.906250e-03 : f32
    %221 = vector.broadcast %cst_163 : f32 to vector<16x1xf32>
    %222 = arith.mulf %220, %221 : vector<16x1xf32>
    %c0_164 = arith.constant 0 : index
    %c0_165 = arith.constant 0 : index
    %223 = vector.load %arg7[%c0_164, %c0_165] : memref<16x4xf32, #tpu.memory_space<vmem>>, vector<16x4xf32>
    %224 = vector.broadcast %222 : vector<16x1xf32> to vector<16x4xf32>
    %225 = arith.mulf %223, %224 : vector<16x4xf32>
    %cst_166 = arith.constant dense<0.000000e+00> : vector<4xf32>
    %226 = vector.multi_reduction <add>, %225, %cst_166 [0] : vector<16x4xf32> to vector<4xf32>
    %227 = vector.shape_cast %226 : vector<4xf32> to vector<1x4xf32>
    %c0_167 = arith.constant 0 : index
    %c0_168 = arith.constant 0 : index
    %228 = vector.load %arg8[%c0_167, %c0_168] : memref<1x4xf32, #tpu.memory_space<vmem>>, vector<1x4xf32>
    %229 = arith.addf %227, %228 : vector<1x4xf32>
    %cst_169 = arith.constant 0.000000e+00 : f32
    %230 = vector.broadcast %cst_169 : f32 to vector<1x4xf32>
    %231 = arith.maximumf %229, %230 : vector<1x4xf32>
    %c0_170 = arith.constant 0 : index
    %c0_171 = arith.constant 0 : index
    %232 = vector.load %arg9[%c0_170, %c0_171] : memref<16x4xf32, #tpu.memory_space<vmem>>, vector<16x4xf32>
    %233 = vector.broadcast %231 : vector<1x4xf32> to vector<16x4xf32>
    %234 = arith.mulf %232, %233 : vector<16x4xf32>
    %cst_172 = arith.constant dense<0.000000e+00> : vector<16xf32>
    %235 = vector.multi_reduction <add>, %234, %cst_172 [1] : vector<16x4xf32> to vector<16xf32>
    %236 = vector.shape_cast %235 : vector<16xf32> to vector<16x1xf32>
    %c0_173 = arith.constant 0 : index
    %c0_174 = arith.constant 0 : index
    %237 = vector.load %arg10[%c0_173, %c0_174] : memref<16x1xf32, #tpu.memory_space<vmem>>, vector<16x1xf32>
    %238 = arith.addf %236, %237 : vector<16x1xf32>
    %239 = arith.negf %238 : vector<16x1xf32>
    %240 = math.exp %239 : vector<16x1xf32>
    %cst_175 = arith.constant 1.000000e+00 : f32
    %241 = vector.broadcast %cst_175 : f32 to vector<16x1xf32>
    %242 = arith.addf %241, %240 : vector<16x1xf32>
    %243 = arith.divf %241, %242 : vector<16x1xf32>
    %244 = vector.broadcast %243 : vector<16x1xf32> to vector<16x256xf32>
    %245 = arith.mulf %218, %244 : vector<16x256xf32>
    %246 = arith.addf %245, %15 : vector<16x256xf32>
    %c0_176 = arith.constant 0 : index
    %c0_177 = arith.constant 0 : index
    %c0_178 = arith.constant 0 : index
    %247 = vector.load %arg11[%c0_176, %c0_177, %c0_178] : memref<2x16x256xf32, #tpu.memory_space<vmem>>, vector<1x16x256xf32>
    %248 = vector.shape_cast %247 : vector<1x16x256xf32> to vector<16x256xf32>
    %249 = vector.shape_cast %246 : vector<16x256xf32> to vector<1x16x256xf32>
    tpu.vector_store %arg11[%c0_176, %c0_177, %c0_178], %249 {strides = array<i32>} : memref<2x16x256xf32, #tpu.memory_space<vmem>>, vector<1x16x256xf32>,
    %250 = vector.extract_strided_slice %217 {offsets = [0, 256], sizes = [16, 256], strides = [1, 1]} : vector<16x512xf32> to vector<16x256xf32>
    %cst_179 = arith.constant dense<0.000000e+00> : vector<16xf32>
    %251 = vector.multi_reduction <add>, %250, %cst_179 [1] : vector<16x256xf32> to vector<16xf32>
    %252 = vector.shape_cast %251 : vector<16xf32> to vector<16x1xf32>
    %cst_180 = arith.constant 3.906250e-03 : f32
    %253 = vector.broadcast %cst_180 : f32 to vector<16x1xf32>
    %254 = arith.mulf %252, %253 : vector<16x1xf32>
    %c0_181 = arith.constant 0 : index
    %c0_182 = arith.constant 0 : index
    %255 = vector.load %arg7[%c0_181, %c0_182] : memref<16x4xf32, #tpu.memory_space<vmem>>, vector<16x4xf32>
    %256 = vector.broadcast %254 : vector<16x1xf32> to vector<16x4xf32>
    %257 = arith.mulf %255, %256 : vector<16x4xf32>
    %cst_183 = arith.constant dense<0.000000e+00> : vector<4xf32>
    %258 = vector.multi_reduction <add>, %257, %cst_183 [0] : vector<16x4xf32> to vector<4xf32>
    %259 = vector.shape_cast %258 : vector<4xf32> to vector<1x4xf32>
    %c0_184 = arith.constant 0 : index
    %c0_185 = arith.constant 0 : index
    %260 = vector.load %arg8[%c0_184, %c0_185] : memref<1x4xf32, #tpu.memory_space<vmem>>, vector<1x4xf32>
    %261 = arith.addf %259, %260 : vector<1x4xf32>
    %cst_186 = arith.constant 0.000000e+00 : f32
    %262 = vector.broadcast %cst_186 : f32 to vector<1x4xf32>
    %263 = arith.maximumf %261, %262 : vector<1x4xf32>
    %c0_187 = arith.constant 0 : index
    %c0_188 = arith.constant 0 : index
    %264 = vector.load %arg9[%c0_187, %c0_188] : memref<16x4xf32, #tpu.memory_space<vmem>>, vector<16x4xf32>
    %265 = vector.broadcast %263 : vector<1x4xf32> to vector<16x4xf32>
    %266 = arith.mulf %264, %265 : vector<16x4xf32>
    %cst_189 = arith.constant dense<0.000000e+00> : vector<16xf32>
    %267 = vector.multi_reduction <add>, %266, %cst_189 [1] : vector<16x4xf32> to vector<16xf32>
    %268 = vector.shape_cast %267 : vector<16xf32> to vector<16x1xf32>
    %c0_190 = arith.constant 0 : index
    %c0_191 = arith.constant 0 : index
    %269 = vector.load %arg10[%c0_190, %c0_191] : memref<16x1xf32, #tpu.memory_space<vmem>>, vector<16x1xf32>
    %270 = arith.addf %268, %269 : vector<16x1xf32>
    %271 = arith.negf %270 : vector<16x1xf32>
    %272 = math.exp %271 : vector<16x1xf32>
    %cst_192 = arith.constant 1.000000e+00 : f32
    %273 = vector.broadcast %cst_192 : f32 to vector<16x1xf32>
    %274 = arith.addf %273, %272 : vector<16x1xf32>
    %275 = arith.divf %273, %274 : vector<16x1xf32>
    %276 = vector.broadcast %275 : vector<16x1xf32> to vector<16x256xf32>
    %277 = arith.mulf %250, %276 : vector<16x256xf32>
    %278 = arith.addf %277, %17 : vector<16x256xf32>
    %c1_193 = arith.constant 1 : index
    %c0_194 = arith.constant 0 : index
    %c0_195 = arith.constant 0 : index
    %279 = vector.load %arg11[%c1_193, %c0_194, %c0_195] : memref<2x16x256xf32, #tpu.memory_space<vmem>>, vector<1x16x256xf32>
    %280 = vector.shape_cast %279 : vector<1x16x256xf32> to vector<16x256xf32>
    %281 = vector.shape_cast %278 : vector<16x256xf32> to vector<1x16x256xf32>
    tpu.vector_store %arg11[%c1_193, %c0_194, %c0_195], %281 {strides = array<i32>} : memref<2x16x256xf32, #tpu.memory_space<vmem>>, vector<1x16x256xf32>,
    return
  }
  func.func @transform_0(%arg0: i32) -> (i32, i32, i32) {
    %c0_i32 = arith.constant 0 : i32
    %c0_i32_0 = arith.constant 0 : i32
    %c0_i32_1 = arith.constant 0 : i32
    return %arg0, %c0_i32, %c0_i32_0 : i32, i32, i32
  }
  func.func @transform_1(%arg0: i32) -> (i32, i32) {
    %c0_i32 = arith.constant 0 : i32
    %c0_i32_0 = arith.constant 0 : i32
    %c0_i32_1 = arith.constant 0 : i32
    return %c0_i32, %c0_i32_0 : i32, i32
  }
  func.func @transform_2(%arg0: i32) -> (i32, i32) {
    %c0_i32 = arith.constant 0 : i32
    %c0_i32_0 = arith.constant 0 : i32
    %c0_i32_1 = arith.constant 0 : i32
    return %c0_i32, %c0_i32_0 : i32, i32
  }
  func.func @transform_3(%arg0: i32) -> (i32, i32) {
    %c0_i32 = arith.constant 0 : i32
    %c0_i32_0 = arith.constant 0 : i32
    %c0_i32_1 = arith.constant 0 : i32
    return %c0_i32, %c0_i32_0 : i32, i32
  }
  func.func @transform_4(%arg0: i32) -> (i32, i32) {
    %c0_i32 = arith.constant 0 : i32
    %c0_i32_0 = arith.constant 0 : i32
    %c0_i32_1 = arith.constant 0 : i32
    return %c0_i32, %c0_i32_0 : i32, i32
  }
  func.func @transform_5(%arg0: i32) -> (i32, i32) {
    %c0_i32 = arith.constant 0 : i32
    %c0_i32_0 = arith.constant 0 : i32
    %c0_i32_1 = arith.constant 0 : i32
    return %c0_i32, %c0_i32_0 : i32, i32
  }
  func.func @transform_6(%arg0: i32) -> (i32, i32) {
    %c0_i32 = arith.constant 0 : i32
    %c0_i32_0 = arith.constant 0 : i32
    %c0_i32_1 = arith.constant 0 : i32
    return %c0_i32, %c0_i32_0 : i32, i32
  }
  func.func @transform_7(%arg0: i32) -> (i32, i32) {
    %c0_i32 = arith.constant 0 : i32
    %c0_i32_0 = arith.constant 0 : i32
    %c0_i32_1 = arith.constant 0 : i32
    return %c0_i32, %c0_i32_0 : i32, i32
  }
  func.func @transform_8(%arg0: i32) -> (i32, i32) {
    %c0_i32 = arith.constant 0 : i32
    %c0_i32_0 = arith.constant 0 : i32
    %c0_i32_1 = arith.constant 0 : i32
    return %c0_i32, %c0_i32_0 : i32, i32
  }
  func.func @transform_9(%arg0: i32) -> (i32, i32) {
    %c0_i32 = arith.constant 0 : i32
    %c0_i32_0 = arith.constant 0 : i32
    %c0_i32_1 = arith.constant 0 : i32
    return %c0_i32, %c0_i32_0 : i32, i32
  }
  func.func @transform_10(%arg0: i32) -> (i32, i32, i32) {
    %c0_i32 = arith.constant 0 : i32
    %c0_i32_0 = arith.constant 0 : i32
    %c0_i32_1 = arith.constant 0 : i32
    return %arg0, %c0_i32, %c0_i32_0 : i32, i32, i32
  }
}

</mosaic_0001>

<llo_original>
// kernel: tpu_custom_call.1
$region0: #{tpu_custom_call.1}
  #allocation0 [shape = 'u32[]', space=smem, size = 0x4, offset = 0x4, fixed_abs, tag = 'smem constant byte address 0x4 - core index']
  #allocation1 [shape = 'u32[144,128]{1,0:T(1,128)}', space=vmem, size = 0x12000, scoped, tag = 'internal scratch']
  #allocation2 [shape = 'f32[16,1024]{1,0:T(8,128)}', space=vmem, size = 0x10000, scoped, tag = 'scratch operand']
  #allocation3 [shape = 'bf16[144,512]{1,0:T(16,128)(2,1)}', space=vmem, size = 0x24000, scoped, tag = 'scratch operand']
  %s0 = inlined_call_operand.vmem [shape: f32[2,16,256], index: 0, kind: input, shape index: {}]
  %s1 = inlined_call_operand.hbm [shape: f32[9,256], index: 1, kind: input, shape index: {}]
  %s2 = inlined_call_operand.vmem [shape: bf16[16,144], index: 2, kind: input, shape index: {}]
  %s3 = inlined_call_operand.vmem [shape: f32[16,1], index: 3, kind: input, shape index: {}]
  %s4 = inlined_call_operand.vmem [shape: bf16[16,144], index: 4, kind: input, shape index: {}]
  %s5 = inlined_call_operand.vmem [shape: f32[16,1], index: 5, kind: input, shape index: {}]
  %s6 = inlined_call_operand.vmem [shape: f32[16,4], index: 6, kind: input, shape index: {}]
  %s7 = inlined_call_operand.vmem [shape: f32[1,4], index: 7, kind: input, shape index: {}]
  %s8 = inlined_call_operand.vmem [shape: f32[16,4], index: 8, kind: input, shape index: {}]
  %s9 = inlined_call_operand.vmem [shape: f32[16,1], index: 9, kind: input, shape index: {}]
  %s10 = inlined_call_operand.hbm [shape: f32[2,16,256], index: 10, kind: output, shape index: {}]
  %s11 = sld [smem:[#allocation0]]
  $region54: #{tpu_custom_call.1} parent=0
    _
  %s13 = ssub.s32 1, %s11
  %s14 = scalar_select 0, %s13, %s11
  $region1: #{tpu_custom_call.1} parent=0
    #allocation4 [shape = 'u8[16384]{0}', space=vmem, size = 0x4000, scoped, tag = 'input window, operand 1, single buffered']
    #allocation5 [shape = 's32[1]{0}', space=sflag, size = 0x4, scoped, tag = 'scoped memory for tpu_custom_call.1']
    #allocation6 [shape = 's32[1]{0}', space=sflag, size = 0x4, scoped, tag = 'scoped memory for tpu_custom_call.1']
    #allocation7 [shape = 'u8[32768]{0}', space=vmem, size = 0x8000, scoped, tag = 'output window, operand 0, single buffered']
    %15 = vsyncpa [#allocation5], 0
    %16 = vsyncpa [#allocation6], 0
    // Predicated region
    $region2: #{tpu_custom_call.1} parent=1 // pred_check
      _
    $region3: #{tpu_custom_call.1} parent=1 // pred_check_branch
      %18 = sbr.rel (0) target = $region5
    $region4: #{tpu_custom_call.1} parent=1 // pred_region
      _
    $region5: #{tpu_custom_call.1} parent=1 // pred_fallthru
      _
    // Predicated region
    $region6: #{tpu_custom_call.1} parent=1 // pred_check
      _
    $region7: #{tpu_custom_call.1} parent=1 // pred_check_branch
      %20 = sbr.rel (0) target = $region9
    $region8: #{tpu_custom_call.1} parent=1 // pred_region
      %s22 = ssub.s32 512, 512
      %23 = vsyncadd [#allocation5], %s22
      %s24 = sshll.u32 [#allocation4], 4
      %s25 = int_to_ptr.vmem [resolvable:$true] %s24
      %30 = dma.hbm_to_vmem [thread:$0]  %s1, 512, %s25, [#allocation5], 256, 256, 16
    $region9: #{tpu_custom_call.1} parent=1 // pred_fallthru
      _
    // Predicated region
    $region10: #{tpu_custom_call.1} parent=1 // pred_check
      _
    $region11: #{tpu_custom_call.1} parent=1 // pred_check_branch
      %32 = sbr.rel (0) target = $region13
    $region12: #{tpu_custom_call.1} parent=1 // pred_region
      _
    $region13: #{tpu_custom_call.1} parent=1 // pred_fallthru
      _
    // Predicated region
    $region14: #{tpu_custom_call.1} parent=1 // pred_check
      _
    $region15: #{tpu_custom_call.1} parent=1 // pred_check_branch
      %34 = sbr.rel (0) target = $region17
    $region16: #{tpu_custom_call.1} parent=1 // pred_region
      _
    $region17: #{tpu_custom_call.1} parent=1 // pred_fallthru
      _
    // Predicated region
    $region18: #{tpu_custom_call.1} parent=1 // pred_check
      _
    $region19: #{tpu_custom_call.1} parent=1 // pred_check_branch
      %36 = sbr.rel (0) target = $region21
    $region20: #{tpu_custom_call.1} parent=1 // pred_region
      _
    $region21: #{tpu_custom_call.1} parent=1 // pred_fallthru
      _
    // Predicated region
    $region22: #{tpu_custom_call.1} parent=1 // pred_check
      _
    $region23: #{tpu_custom_call.1} parent=1 // pred_check_branch
      %38 = sbr.rel (0) target = $region25
    $region24: #{tpu_custom_call.1} parent=1 // pred_region
      _
    $region25: #{tpu_custom_call.1} parent=1 // pred_fallthru
      _
    // Predicated region
    $region26: #{tpu_custom_call.1} parent=1 // pred_check
      _
    $region27: #{tpu_custom_call.1} parent=1 // pred_check_branch
      %40 = sbr.rel (0) target = $region29
    $region28: #{tpu_custom_call.1} parent=1 // pred_region
      _
    $region29: #{tpu_custom_call.1} parent=1 // pred_fallthru
      _
    // Predicated region
    $region30: #{tpu_custom_call.1} parent=1 // pred_check
      _
    $region31: #{tpu_custom_call.1} parent=1 // pred_check_branch
      %42 = sbr.rel (0) target = $region33
    $region32: #{tpu_custom_call.1} parent=1 // pred_region
      _
    $region33: #{tpu_custom_call.1} parent=1 // pred_fallthru
      _
    // Predicated region
    $region34: #{tpu_custom_call.1} parent=1 // pred_check
      _
    $region35: #{tpu_custom_call.1} parent=1 // pred_check_branch
      %44 = sbr.rel (0) target = $region37
    $region36: #{tpu_custom_call.1} parent=1 // pred_region
      _
    $region37: #{tpu_custom_call.1} parent=1 // pred_fallthru
      _
    // Predicated region
    $region38: #{tpu_custom_call.1} parent=1 // pred_check
      _
    $region39: #{tpu_custom_call.1} parent=1 // pred_check_branch
      %46 = sbr.rel (0) target = $region41
    $region40: #{tpu_custom_call.1} parent=1 // pred_region
      _
    $region41: #{tpu_custom_call.1} parent=1 // pred_fallthru
      _
    // Predicated region
    $region42: #{tpu_custom_call.1} parent=1 // pred_check
      _
    $region43: #{tpu_custom_call.1} parent=1 // pred_check_branch
      %48 = sbr.rel (0) target = $region45
    $region44: #{tpu_custom_call.1} parent=1 // pred_region
      %49 = dma.done [#allocation5], 512
    $region45: #{tpu_custom_call.1} parent=1 // pred_fallthru
      _
    %v51 = vld [vmem:[#allocation4] ss:$8 sm:$0x3]
    %s52 = scalar_lea.vmem [#allocation4], 1
    %v53 = vld [vmem:[%s52] ss:$8 sm:$0x3]
    %s54 = scalar_lea.vmem [#allocation4], 2
    %v55 = vld [vmem:[%s54] ss:$8 sm:$0x3]
    %s56 = scalar_lea.vmem [#allocation4], 3
    %v57 = vld [vmem:[%s56] ss:$8 sm:$0x3]
    %s58 = scalar_lea.vmem [#allocation4], 4
    %v59 = vld [vmem:[%s58] ss:$8 sm:$0x3]
    %s60 = scalar_lea.vmem [#allocation4], 5
    %v61 = vld [vmem:[%s60] ss:$8 sm:$0x3]
    %s62 = scalar_lea.vmem [#allocation4], 6
    %v63 = vld [vmem:[%s62] ss:$8 sm:$0x3]
    %s64 = scalar_lea.vmem [#allocation4], 7
    %v65 = vld [vmem:[%s64] ss:$8 sm:$0x3]
    %s66 = scalar_lea.vmem [#allocation4], 16
    %v67 = vld [vmem:[%s66] ss:$8 sm:$0x3]
    %68 = vst [vmem:[#allocation2] sm:$0xff] 0.0
    %69 = vst [vmem:[#allocation2 + $0x40] sm:$0xff] 0.0
    %70 = vst [vmem:[#allocation2 + $0x18] sm:$0xff] 0.0
    %71 = vst [vmem:[#allocation2 + $0x58] sm:$0xff] 0.0
    %72 = vst [vmem:[#allocation2 + $0x20] sm:$0xff] 0.0
    %73 = vst [vmem:[#allocation2 + $0x60] sm:$0xff] 0.0
    %74 = vst [vmem:[#allocation2 + $0x38] sm:$0xff] 0.0
    %75 = vst [vmem:[#allocation2 + $0x78] sm:$0xff] 0.0
    %v76 = vld [vmem:[%s0] sm:$0xff]
    %v77 = vld [vmem:[%s0 + $0x8] sm:$0xff]
    %v78 = vld [vmem:[%s0 + $0x10] sm:$0xff]
    %v79 = vld [vmem:[%s0 + $0x18] sm:$0xff]
    %s80 = scalar_lea.vmem %s0, 32
    %v81 = vld [vmem:[%s80] sm:$0xff]
    %v82 = vld [vmem:[%s80 + $0x8] sm:$0xff]
    %v83 = vld [vmem:[%s80 + $0x10] sm:$0xff]
    %v84 = vld [vmem:[%s80 + $0x18] sm:$0xff]
    %85 = vst [vmem:[#allocation2 + $0x8] sm:$0xff] %v76
    %86 = vst [vmem:[#allocation2 + $0x10] sm:$0xff] %v77
    %87 = vst [vmem:[#allocation2 + $0x48] sm:$0xff] %v78
    %88 = vst [vmem:[#allocation2 + $0x50] sm:$0xff] %v79
    %89 = vst [vmem:[#allocation2 + $0x28] sm:$0xff] %v81
    %90 = vst [vmem:[#allocation2 + $0x30] sm:$0xff] %v82
    %91 = vst [vmem:[#allocation2 + $0x68] sm:$0xff] %v83
    %92 = vst [vmem:[#allocation2 + $0x70] sm:$0xff] %v84
    %v93 = vld [vmem:[#allocation2] sm:$0xff]
    %v94 = vld [vmem:[#allocation2 + $0x8] sm:$0xff]
    %v95 = vld [vmem:[#allocation2 + $0x10] sm:$0xff]
    %v96 = vld [vmem:[#allocation2 + $0x40] sm:$0xff]
    %v97 = vld [vmem:[#allocation2 + $0x48] sm:$0xff]
    %v98 = vld [vmem:[#allocation2 + $0x50] sm:$0xff]
    %v100 = vlaneseq
    %v101 = vshrl.u32 %v100, 7
    %v102 = vsub.s32 0, %v101
    %v103 = vrot.slane %v51, %v102
    %v104 = vlaneseq
    %v105 = vshrl.u32 %v104, 7
    %v106 = vsub.s32 1, %v105
    %v107 = vrot.slane %v51, %v106
    %108 = vrot.lane.b32.xlu0 %v103, 111
    %v109 = vpop.permute.xlu0 %108
    %110 = vrot.lane.b32.xlu0 %v107, 111
    %v111 = vpop.permute.xlu0 %110
    %vm112 = vcmask 908288
    %v113 = vsel %vm112, %v109, %v111
    %v117 = vmul.f32 %v93, %v109
    %v118 = vmul.f32 %v94, %v113
    %v119 = vmul.f32 %v95, %v111
    %v120 = vmul.f32 %v96, %v109
    %v121 = vmul.f32 %v97, %v113
    %v122 = vmul.f32 %v98, %v111
    %v123 = vpack.c.bf16 %v120, %v117
    %v124 = vpack.c.bf16 %v121, %v118
    %v125 = vpack.c.bf16 %v122, %v119
    %129 = vrot.lane.b32.xlu0 %v123, 17
    %v130 = vpop.permute.xlu0 %129
    %131 = vrot.lane.b32.xlu0 %v124, 17
    %v132 = vpop.permute.xlu0 %131
    %133 = vrot.lane.b32.xlu0 %v125, 17
    %v134 = vpop.permute.xlu0 %133
    %vm135 = vcmask 138240
    %v136 = vsel %vm135, %v130, %v132
    %v137 = vsel %vm135, %v132, %v134
    %140 = vst [vmem:[#allocation3] sm:$0xff] %v136
    %141 = vst [vmem:[#allocation3 + $0x8] sm:$0xff] %v137
    %v142 = vld [vmem:[#allocation2] sm:$0xff]
    %v143 = vld [vmem:[#allocation2 + $0x8] sm:$0xff]
    %v144 = vld [vmem:[#allocation2 + $0x10] sm:$0xff]
    %v145 = vld [vmem:[#allocation2 + $0x40] sm:$0xff]
    %v146 = vld [vmem:[#allocation2 + $0x48] sm:$0xff]
    %v147 = vld [vmem:[#allocation2 + $0x50] sm:$0xff]
    %v149 = vlaneseq
    %v150 = vshrl.u32 %v149, 7
    %v151 = vsub.s32 0, %v150
    %v152 = vrot.slane %v53, %v151
    %v153 = vlaneseq
    %v154 = vshrl.u32 %v153, 7
    %v155 = vsub.s32 1, %v154
    %v156 = vrot.slane %v53, %v155
    %157 = vrot.lane.b32.xlu0 %v152, 112
    %v158 = vpop.permute.xlu0 %157
    %159 = vrot.lane.b32.xlu0 %v156, 112
    %v160 = vpop.permute.xlu0 %159
    %vm161 = vcmask 916480
    %v162 = vsel %vm161, %v158, %v160
    %v166 = vmul.f32 %v142, %v158
    %v167 = vmul.f32 %v143, %v162
    %v168 = vmul.f32 %v144, %v160
    %v169 = vmul.f32 %v145, %v158
    %v170 = vmul.f32 %v146, %v162
    %v171 = vmul.f32 %v147, %v160
    %v172 = vpack.c.bf16 %v169, %v166
    %v173 = vpack.c.bf16 %v170, %v167
    %v174 = vpack.c.bf16 %v171, %v168
    %178 = vrot.lane.b32.xlu0 %v172, 16
    %v179 = vpop.permute.xlu0 %178
    %180 = vrot.lane.b32.xlu0 %v173, 16
    %v181 = vpop.permute.xlu0 %180
    %182 = vrot.lane.b32.xlu0 %v174, 16
    %v183 = vpop.permute.xlu0 %182
    %vm184 = vcmask 130048
    %v185 = vsel %vm184, %v179, %v181
    %v186 = vsel %vm184, %v181, %v183
    %189 = vst [vmem:[#allocation3 + $0x20] sm:$0xff] %v185
    %190 = vst [vmem:[#allocation3 + $0x28] sm:$0xff] %v186
    %v191 = vld [vmem:[#allocation2] sm:$0xff]
    %v192 = vld [vmem:[#allocation2 + $0x8] sm:$0xff]
    %v193 = vld [vmem:[#allocation2 + $0x10] sm:$0xff]
    %v194 = vld [vmem:[#allocation2 + $0x40] sm:$0xff]
    %v195 = vld [vmem:[#allocation2 + $0x48] sm:$0xff]
    %v196 = vld [vmem:[#allocation2 + $0x50] sm:$0xff]
    %v198 = vlaneseq
    %v199 = vshrl.u32 %v198, 7
    %v200 = vsub.s32 0, %v199
    %v201 = vrot.slane %v55, %v200
    %v202 = vlaneseq
    %v203 = vshrl.u32 %v202, 7
    %v204 = vsub.s32 1, %v203
    %v205 = vrot.slane %v55, %v204
    %206 = vrot.lane.b32.xlu0 %v201, 113
    %v207 = vpop.permute.xlu0 %206
    %208 = vrot.lane.b32.xlu0 %v205, 113
    %v209 = vpop.permute.xlu0 %208
    %vm210 = vcmask 924672
    %v211 = vsel %vm210, %v207, %v209
    %v215 = vmul.f32 %v191, %v207
    %v216 = vmul.f32 %v192, %v211
    %v217 = vmul.f32 %v193, %v209
    %v218 = vmul.f32 %v194, %v207
    %v219 = vmul.f32 %v195, %v211
    %v220 = vmul.f32 %v196, %v209
    %v221 = vpack.c.bf16 %v218, %v215
    %v222 = vpack.c.bf16 %v219, %v216
    %v223 = vpack.c.bf16 %v220, %v217
    %227 = vrot.lane.b32.xlu0 %v221, 15
    %v228 = vpop.permute.xlu0 %227
    %229 = vrot.lane.b32.xlu0 %v222, 15
    %v230 = vpop.permute.xlu0 %229
    %231 = vrot.lane.b32.xlu0 %v223, 15
    %v232 = vpop.permute.xlu0 %231
    %vm233 = vcmask 121856
    %v234 = vsel %vm233, %v228, %v230
    %v235 = vsel %vm233, %v230, %v232
    %238 = vst [vmem:[#allocation3 + $0x40] sm:$0xff] %v234
    %239 = vst [vmem:[#allocation3 + $0x48] sm:$0xff] %v235
    %v240 = vld [vmem:[#allocation2] sm:$0xff]
    %v241 = vld [vmem:[#allocation2 + $0x8] sm:$0xff]
    %v242 = vld [vmem:[#allocation2 + $0x10] sm:$0xff]
    %v243 = vld [vmem:[#allocation2 + $0x40] sm:$0xff]
    %v244 = vld [vmem:[#allocation2 + $0x48] sm:$0xff]
    %v245 = vld [vmem:[#allocation2 + $0x50] sm:$0xff]
    %v247 = vlaneseq
    %v248 = vshrl.u32 %v247, 7
    %v249 = vsub.s32 0, %v248
    %v250 = vrot.slane %v57, %v249
    %v251 = vlaneseq
    %v252 = vshrl.u32 %v251, 7
    %v253 = vsub.s32 1, %v252
    %v254 = vrot.slane %v57, %v253
    %255 = vrot.lane.b32.xlu0 %v250, 127
    %v256 = vpop.permute.xlu0 %255
    %257 = vrot.lane.b32.xlu0 %v254, 127
    %v258 = vpop.permute.xlu0 %257
    %vm259 = vcmask 1039360
    %v260 = vsel %vm259, %v256, %v258
    %v264 = vmul.f32 %v240, %v256
    %v265 = vmul.f32 %v241, %v260
    %v266 = vmul.f32 %v242, %v258
    %v267 = vmul.f32 %v243, %v256
    %v268 = vmul.f32 %v244, %v260
    %v269 = vmul.f32 %v245, %v258
    %v270 = vpack.c.bf16 %v267, %v264
    %v271 = vpack.c.bf16 %v268, %v265
    %v272 = vpack.c.bf16 %v269, %v266
    %276 = vrot.lane.b32.xlu0 %v270, 1
    %v277 = vpop.permute.xlu0 %276
    %278 = vrot.lane.b32.xlu0 %v271, 1
    %v279 = vpop.permute.xlu0 %278
    %280 = vrot.lane.b32.xlu0 %v272, 1
    %v281 = vpop.permute.xlu0 %280
    %vm282 = vcmask 7168
    %v283 = vsel %vm282, %v277, %v279
    %v284 = vsel %vm282, %v279, %v281
    %287 = vst [vmem:[#allocation3 + $0x60] sm:$0xff] %v283
    %288 = vst [vmem:[#allocation3 + $0x68] sm:$0xff] %v284
    %v289 = vld [vmem:[#allocation2 + $0x8] sm:$0xff]
    %v290 = vld [vmem:[#allocation2 + $0x10] sm:$0xff]
    %v291 = vld [vmem:[#allocation2 + $0x48] sm:$0xff]
    %v292 = vld [vmem:[#allocation2 + $0x50] sm:$0xff]
    %v294 = vlaneseq
    %v295 = vshrl.u32 %v294, 7
    %v296 = vsub.s32 0, %v295
    %v297 = vrot.slane %v59, %v296
    %v298 = vlaneseq
    %v299 = vshrl.u32 %v298, 7
    %v300 = vsub.s32 1, %v299
    %v301 = vrot.slane %v59, %v300
    %v304 = vmul.f32 %v289, %v297
    %v305 = vmul.f32 %v290, %v301
    %v306 = vmul.f32 %v291, %v297
    %v307 = vmul.f32 %v292, %v301
    %v308 = vpack.c.bf16 %v306, %v304
    %v309 = vpack.c.bf16 %v307, %v305
    %310 = vst [vmem:[#allocation3 + $0x80] sm:$0xff] %v308
    %311 = vst [vmem:[#allocation3 + $0x88] sm:$0xff] %v309
    %v312 = vld [vmem:[#allocation2 + $0x8] sm:$0xff]
    %v313 = vld [vmem:[#allocation2 + $0x10] sm:$0xff]
    %v314 = vld [vmem:[#allocation2 + $0x18] sm:$0xff]
    %v315 = vld [vmem:[#allocation2 + $0x48] sm:$0xff]
    %v316 = vld [vmem:[#allocation2 + $0x50] sm:$0xff]
    %v317 = vld [vmem:[#allocation2 + $0x58] sm:$0xff]
    %v319 = vlaneseq
    %v320 = vshrl.u32 %v319, 7
    %v321 = vsub.s32 0, %v320
    %v322 = vrot.slane %v61, %v321
    %v323 = vlaneseq
    %v324 = vshrl.u32 %v323, 7
    %v325 = vsub.s32 1, %v324
    %v326 = vrot.slane %v61, %v325
    %327 = vrot.lane.b32.xlu0 %v322, 1
    %v328 = vpop.permute.xlu0 %327
    %329 = vrot.lane.b32.xlu0 %v326, 1
    %v330 = vpop.permute.xlu0 %329
    %vm331 = vcmask 7168
    %v332 = vsel %vm331, %v328, %v330
    %v336 = vmul.f32 %v312, %v328
    %v337 = vmul.f32 %v313, %v332
    %v338 = vmul.f32 %v314, %v330
    %v339 = vmul.f32 %v315, %v328
    %v340 = vmul.f32 %v316, %v332
    %v341 = vmul.f32 %v317, %v330
    %v342 = vpack.c.bf16 %v339, %v336
    %v343 = vpack.c.bf16 %v340, %v337
    %v344 = vpack.c.bf16 %v341, %v338
    %348 = vrot.lane.b32.xlu0 %v342, 127
    %v349 = vpop.permute.xlu0 %348
    %350 = vrot.lane.b32.xlu0 %v343, 127
    %v351 = vpop.permute.xlu0 %350
    %352 = vrot.lane.b32.xlu0 %v344, 127
    %v353 = vpop.permute.xlu0 %352
    %vm354 = vcmask 1039360
    %v355 = vsel %vm354, %v349, %v351
    %v356 = vsel %vm354, %v351, %v353
    %359 = vst [vmem:[#allocation3 + $0xa0] sm:$0xff] %v355
    %360 = vst [vmem:[#allocation3 + $0xa8] sm:$0xff] %v356
    %v361 = vld [vmem:[#allocation2 + $0x8] sm:$0xff]
    %v362 = vld [vmem:[#allocation2 + $0x10] sm:$0xff]
    %v363 = vld [vmem:[#allocation2 + $0x18] sm:$0xff]
    %v364 = vld [vmem:[#allocation2 + $0x48] sm:$0xff]
    %v365 = vld [vmem:[#allocation2 + $0x50] sm:$0xff]
    %v366 = vld [vmem:[#allocation2 + $0x58] sm:$0xff]
    %v368 = vlaneseq
    %v369 = vshrl.u32 %v368, 7
    %v370 = vsub.s32 0, %v369
    %v371 = vrot.slane %v63, %v370
    %v372 = vlaneseq
    %v373 = vshrl.u32 %v372, 7
    %v374 = vsub.s32 1, %v373
    %v375 = vrot.slane %v63, %v374
    %376 = vrot.lane.b32.xlu0 %v371, 15
    %v377 = vpop.permute.xlu0 %376
    %378 = vrot.lane.b32.xlu0 %v375, 15
    %v379 = vpop.permute.xlu0 %378
    %vm380 = vcmask 121856
    %v381 = vsel %vm380, %v377, %v379
    %v385 = vmul.f32 %v361, %v377
    %v386 = vmul.f32 %v362, %v381
    %v387 = vmul.f32 %v363, %v379
    %v388 = vmul.f32 %v364, %v377
    %v389 = vmul.f32 %v365, %v381
    %v390 = vmul.f32 %v366, %v379
    %v391 = vpack.c.bf16 %v388, %v385
    %v392 = vpack.c.bf16 %v389, %v386
    %v393 = vpack.c.bf16 %v390, %v387
    %397 = vrot.lane.b32.xlu0 %v391, 113
    %v398 = vpop.permute.xlu0 %397
    %399 = vrot.lane.b32.xlu0 %v392, 113
    %v400 = vpop.permute.xlu0 %399
    %401 = vrot.lane.b32.xlu0 %v393, 113
    %v402 = vpop.permute.xlu0 %401
    %vm403 = vcmask 924672
    %v404 = vsel %vm403, %v398, %v400
    %v405 = vsel %vm403, %v400, %v402
    %408 = vst [vmem:[#allocation3 + $0xc0] sm:$0xff] %v404
    %409 = vst [vmem:[#allocation3 + $0xc8] sm:$0xff] %v405
    %v410 = vld [vmem:[#allocation2 + $0x8] sm:$0xff]
    %v411 = vld [vmem:[#allocation2 + $0x10] sm:$0xff]
    %v412 = vld [vmem:[#allocation2 + $0x18] sm:$0xff]
    %v413 = vld [vmem:[#allocation2 + $0x48] sm:$0xff]
    %v414 = vld [vmem:[#allocation2 + $0x50] sm:$0xff]
    %v415 = vld [vmem:[#allocation2 + $0x58] sm:$0xff]
    %v417 = vlaneseq
    %v418 = vshrl.u32 %v417, 7
    %v419 = vsub.s32 0, %v418
    %v420 = vrot.slane %v65, %v419
    %v421 = vlaneseq
    %v422 = vshrl.u32 %v421, 7
    %v423 = vsub.s32 1, %v422
    %v424 = vrot.slane %v65, %v423
    %425 = vrot.lane.b32.xlu0 %v420, 16
    %v426 = vpop.permute.xlu0 %425
    %427 = vrot.lane.b32.xlu0 %v424, 16
    %v428 = vpop.permute.xlu0 %427
    %vm429 = vcmask 130048
    %v430 = vsel %vm429, %v426, %v428
    %v434 = vmul.f32 %v410, %v426
    %v435 = vmul.f32 %v411, %v430
    %v436 = vmul.f32 %v412, %v428
    %v437 = vmul.f32 %v413, %v426
    %v438 = vmul.f32 %v414, %v430
    %v439 = vmul.f32 %v415, %v428
    %v440 = vpack.c.bf16 %v437, %v434
    %v441 = vpack.c.bf16 %v438, %v435
    %v442 = vpack.c.bf16 %v439, %v436
    %446 = vrot.lane.b32.xlu0 %v440, 112
    %v447 = vpop.permute.xlu0 %446
    %448 = vrot.lane.b32.xlu0 %v441, 112
    %v449 = vpop.permute.xlu0 %448
    %450 = vrot.lane.b32.xlu0 %v442, 112
    %v451 = vpop.permute.xlu0 %450
    %vm452 = vcmask 916480
    %v453 = vsel %vm452, %v447, %v449
    %v454 = vsel %vm452, %v449, %v451
    %457 = vst [vmem:[#allocation3 + $0xe0] sm:$0xff] %v453
    %458 = vst [vmem:[#allocation3 + $0xe8] sm:$0xff] %v454
    %v459 = vld [vmem:[#allocation2 + $0x8] sm:$0xff]
    %v460 = vld [vmem:[#allocation2 + $0x10] sm:$0xff]
    %v461 = vld [vmem:[#allocation2 + $0x18] sm:$0xff]
    %v462 = vld [vmem:[#allocation2 + $0x48] sm:$0xff]
    %v463 = vld [vmem:[#allocation2 + $0x50] sm:$0xff]
    %v464 = vld [vmem:[#allocation2 + $0x58] sm:$0xff]
    %v466 = vlaneseq
    %v467 = vshrl.u32 %v466, 7
    %v468 = vsub.s32 0, %v467
    %v469 = vrot.slane %v67, %v468
    %v470 = vlaneseq
    %v471 = vshrl.u32 %v470, 7
    %v472 = vsub.s32 1, %v471
    %v473 = vrot.slane %v67, %v472
    %474 = vrot.lane.b32.xlu0 %v469, 17
    %v475 = vpop.permute.xlu0 %474
    %476 = vrot.lane.b32.xlu0 %v473, 17
    %v477 = vpop.permute.xlu0 %476
    %vm478 = vcmask 138240
    %v479 = vsel %vm478, %v475, %v477
    %v483 = vmul.f32 %v459, %v475
    %v484 = vmul.f32 %v460, %v479
    %v485 = vmul.f32 %v461, %v477
    %v486 = vmul.f32 %v462, %v475
    %v487 = vmul.f32 %v463, %v479
    %v488 = vmul.f32 %v464, %v477
    %v489 = vpack.c.bf16 %v486, %v483
    %v490 = vpack.c.bf16 %v487, %v484
    %v491 = vpack.c.bf16 %v488, %v485
    %495 = vrot.lane.b32.xlu0 %v489, 111
    %v496 = vpop.permute.xlu0 %495
    %497 = vrot.lane.b32.xlu0 %v490, 111
    %v498 = vpop.permute.xlu0 %497
    %499 = vrot.lane.b32.xlu0 %v491, 111
    %v500 = vpop.permute.xlu0 %499
    %vm501 = vcmask 908288
    %v502 = vsel %vm501, %v496, %v498
    %v503 = vsel %vm501, %v498, %v500
    %506 = vst [vmem:[#allocation3 + $0x100] sm:$0xff] %v502
    %507 = vst [vmem:[#allocation3 + $0x108] sm:$0xff] %v503
    %v508 = vld [vmem:[#allocation2 + $0x20] sm:$0xff]
    %v509 = vld [vmem:[#allocation2 + $0x28] sm:$0xff]
    %v510 = vld [vmem:[#allocation2 + $0x30] sm:$0xff]
    %v511 = vld [vmem:[#allocation2 + $0x60] sm:$0xff]
    %v512 = vld [vmem:[#allocation2 + $0x68] sm:$0xff]
    %v513 = vld [vmem:[#allocation2 + $0x70] sm:$0xff]
    %v514 = vmul.f32 %v508, %v109
    %v515 = vmul.f32 %v509, %v113
    %v516 = vmul.f32 %v510, %v111
    %v517 = vmul.f32 %v511, %v109
    %v518 = vmul.f32 %v512, %v113
    %v519 = vmul.f32 %v513, %v111
    %v520 = vpack.c.bf16 %v517, %v514
    %v521 = vpack.c.bf16 %v518, %v515
    %v522 = vpack.c.bf16 %v519, %v516
    %526 = vrot.lane.b32.xlu0 %v520, 17
    %v527 = vpop.permute.xlu0 %526
    %528 = vrot.lane.b32.xlu0 %v521, 17
    %v529 = vpop.permute.xlu0 %528
    %530 = vrot.lane.b32.xlu0 %v522, 17
    %v531 = vpop.permute.xlu0 %530
    %v532 = vsel %vm135, %v527, %v529
    %v533 = vsel %vm135, %v529, %v531
    %536 = vst [vmem:[#allocation3 + $0x10] sm:$0xff] %v532
    %537 = vst [vmem:[#allocation3 + $0x18] sm:$0xff] %v533
    %v538 = vld [vmem:[#allocation2 + $0x20] sm:$0xff]
    %v539 = vld [vmem:[#allocation2 + $0x28] sm:$0xff]
    %v540 = vld [vmem:[#allocation2 + $0x30] sm:$0xff]
    %v541 = vld [vmem:[#allocation2 + $0x60] sm:$0xff]
    %v542 = vld [vmem:[#allocation2 + $0x68] sm:$0xff]
    %v543 = vld [vmem:[#allocation2 + $0x70] sm:$0xff]
    %v544 = vmul.f32 %v538, %v158
    %v545 = vmul.f32 %v539, %v162
    %v546 = vmul.f32 %v540, %v160
    %v547 = vmul.f32 %v541, %v158
    %v548 = vmul.f32 %v542, %v162
    %v549 = vmul.f32 %v543, %v160
    %v550 = vpack.c.bf16 %v547, %v544
    %v551 = vpack.c.bf16 %v548, %v545
    %v552 = vpack.c.bf16 %v549, %v546
    %556 = vrot.lane.b32.xlu0 %v550, 16
    %v557 = vpop.permute.xlu0 %556
    %558 = vrot.lane.b32.xlu0 %v551, 16
    %v559 = vpop.permute.xlu0 %558
    %560 = vrot.lane.b32.xlu0 %v552, 16
    %v561 = vpop.permute.xlu0 %560
    %v562 = vsel %vm184, %v557, %v559
    %v563 = vsel %vm184, %v559, %v561
    %566 = vst [vmem:[#allocation3 + $0x30] sm:$0xff] %v562
    %567 = vst [vmem:[#allocation3 + $0x38] sm:$0xff] %v563
    %v568 = vld [vmem:[#allocation2 + $0x20] sm:$0xff]
    %v569 = vld [vmem:[#allocation2 + $0x28] sm:$0xff]
    %v570 = vld [vmem:[#allocation2 + $0x30] sm:$0xff]
    %v571 = vld [vmem:[#allocation2 + $0x60] sm:$0xff]
    %v572 = vld [vmem:[#allocation2 + $0x68] sm:$0xff]
    %v573 = vld [vmem:[#allocation2 + $0x70] sm:$0xff]
    %v574 = vmul.f32 %v568, %v207
    %v575 = vmul.f32 %v569, %v211
    %v576 = vmul.f32 %v570, %v209
    %v577 = vmul.f32 %v571, %v207
    %v578 = vmul.f32 %v572, %v211
    %v579 = vmul.f32 %v573, %v209
    %v580 = vpack.c.bf16 %v577, %v574
    %v581 = vpack.c.bf16 %v578, %v575
    %v582 = vpack.c.bf16 %v579, %v576
    %586 = vrot.lane.b32.xlu0 %v580, 15
    %v587 = vpop.permute.xlu0 %586
    %588 = vrot.lane.b32.xlu0 %v581, 15
    %v589 = vpop.permute.xlu0 %588
    %590 = vrot.lane.b32.xlu0 %v582, 15
    %v591 = vpop.permute.xlu0 %590
    %v592 = vsel %vm233, %v587, %v589
    %v593 = vsel %vm233, %v589, %v591
    %596 = vst [vmem:[#allocation3 + $0x50] sm:$0xff] %v592
    %597 = vst [vmem:[#allocation3 + $0x58] sm:$0xff] %v593
    %v598 = vld [vmem:[#allocation2 + $0x20] sm:$0xff]
    %v599 = vld [vmem:[#allocation2 + $0x28] sm:$0xff]
    %v600 = vld [vmem:[#allocation2 + $0x30] sm:$0xff]
    %v601 = vld [vmem:[#allocation2 + $0x60] sm:$0xff]
    %v602 = vld [vmem:[#allocation2 + $0x68] sm:$0xff]
    %v603 = vld [vmem:[#allocation2 + $0x70] sm:$0xff]
    %v604 = vmul.f32 %v598, %v256
    %v605 = vmul.f32 %v599, %v260
    %v606 = vmul.f32 %v600, %v258
    %v607 = vmul.f32 %v601, %v256
    %v608 = vmul.f32 %v602, %v260
    %v609 = vmul.f32 %v603, %v258
    %v610 = vpack.c.bf16 %v607, %v604
    %v611 = vpack.c.bf16 %v608, %v605
    %v612 = vpack.c.bf16 %v609, %v606
    %616 = vrot.lane.b32.xlu0 %v610, 1
    %v617 = vpop.permute.xlu0 %616
    %618 = vrot.lane.b32.xlu0 %v611, 1
    %v619 = vpop.permute.xlu0 %618
    %620 = vrot.lane.b32.xlu0 %v612, 1
    %v621 = vpop.permute.xlu0 %620
    %v622 = vsel %vm282, %v617, %v619
    %v623 = vsel %vm282, %v619, %v621
    %626 = vst [vmem:[#allocation3 + $0x70] sm:$0xff] %v622
    %627 = vst [vmem:[#allocation3 + $0x78] sm:$0xff] %v623
    %v628 = vld [vmem:[#allocation2 + $0x28] sm:$0xff]
    %v629 = vld [vmem:[#allocation2 + $0x30] sm:$0xff]
    %v630 = vld [vmem:[#allocation2 + $0x68] sm:$0xff]
    %v631 = vld [vmem:[#allocation2 + $0x70] sm:$0xff]
    %v632 = vmul.f32 %v628, %v297
    %v633 = vmul.f32 %v629, %v301
    %v634 = vmul.f32 %v630, %v297
    %v635 = vmul.f32 %v631, %v301
    %v636 = vpack.c.bf16 %v634, %v632
    %v637 = vpack.c.bf16 %v635, %v633
    %638 = vst [vmem:[#allocation3 + $0x90] sm:$0xff] %v636
    %639 = vst [vmem:[#allocation3 + $0x98] sm:$0xff] %v637
    %v640 = vld [vmem:[#allocation2 + $0x28] sm:$0xff]
    %v641 = vld [vmem:[#allocation2 + $0x30] sm:$0xff]
    %v642 = vld [vmem:[#allocation2 + $0x38] sm:$0xff]
    %v643 = vld [vmem:[#allocation2 + $0x68] sm:$0xff]
    %v644 = vld [vmem:[#allocation2 + $0x70] sm:$0xff]
    %v645 = vld [vmem:[#allocation2 + $0x78] sm:$0xff]
    %v646 = vmul.f32 %v640, %v328
    %v647 = vmul.f32 %v641, %v332
    %v648 = vmul.f32 %v642, %v330
    %v649 = vmul.f32 %v643, %v328
    %v650 = vmul.f32 %v644, %v332
    %v651 = vmul.f32 %v645, %v330
    %v652 = vpack.c.bf16 %v649, %v646
    %v653 = vpack.c.bf16 %v650, %v647
    %v654 = vpack.c.bf16 %v651, %v648
    %658 = vrot.lane.b32.xlu0 %v652, 127
    %v659 = vpop.permute.xlu0 %658
    %660 = vrot.lane.b32.xlu0 %v653, 127
    %v661 = vpop.permute.xlu0 %660
    %662 = vrot.lane.b32.xlu0 %v654, 127
    %v663 = vpop.permute.xlu0 %662
    %v664 = vsel %vm354, %v659, %v661
    %v665 = vsel %vm354, %v661, %v663
    %668 = vst [vmem:[#allocation3 + $0xb0] sm:$0xff] %v664
    %669 = vst [vmem:[#allocation3 + $0xb8] sm:$0xff] %v665
    %v670 = vld [vmem:[#allocation2 + $0x28] sm:$0xff]
    %v671 = vld [vmem:[#allocation2 + $0x30] sm:$0xff]
    %v672 = vld [vmem:[#allocation2 + $0x38] sm:$0xff]
    %v673 = vld [vmem:[#allocation2 + $0x68] sm:$0xff]
    %v674 = vld [vmem:[#allocation2 + $0x70] sm:$0xff]
    %v675 = vld [vmem:[#allocation2 + $0x78] sm:$0xff]
    %v676 = vmul.f32 %v670, %v377
    %v677 = vmul.f32 %v671, %v381
    %v678 = vmul.f32 %v672, %v379
    %v679 = vmul.f32 %v673, %v377
    %v680 = vmul.f32 %v674, %v381
    %v681 = vmul.f32 %v675, %v379
    %v682 = vpack.c.bf16 %v679, %v676
    %v683 = vpack.c.bf16 %v680, %v677
    %v684 = vpack.c.bf16 %v681, %v678
    %688 = vrot.lane.b32.xlu0 %v682, 113
    %v689 = vpop.permute.xlu0 %688
    %690 = vrot.lane.b32.xlu0 %v683, 113
    %v691 = vpop.permute.xlu0 %690
    %692 = vrot.lane.b32.xlu0 %v684, 113
    %v693 = vpop.permute.xlu0 %692
    %v694 = vsel %vm403, %v689, %v691
    %v695 = vsel %vm403, %v691, %v693
    %698 = vst [vmem:[#allocation3 + $0xd0] sm:$0xff] %v694
    %699 = vst [vmem:[#allocation3 + $0xd8] sm:$0xff] %v695
    %v700 = vld [vmem:[#allocation2 + $0x28] sm:$0xff]
    %v701 = vld [vmem:[#allocation2 + $0x30] sm:$0xff]
    %v702 = vld [vmem:[#allocation2 + $0x38] sm:$0xff]
    %v703 = vld [vmem:[#allocation2 + $0x68] sm:$0xff]
    %v704 = vld [vmem:[#allocation2 + $0x70] sm:$0xff]
    %v705 = vld [vmem:[#allocation2 + $0x78] sm:$0xff]
    %v706 = vmul.f32 %v700, %v426
    %v707 = vmul.f32 %v701, %v430
    %v708 = vmul.f32 %v702, %v428
    %v709 = vmul.f32 %v703, %v426
    %v710 = vmul.f32 %v704, %v430
    %v711 = vmul.f32 %v705, %v428
    %v712 = vpack.c.bf16 %v709, %v706
    %v713 = vpack.c.bf16 %v710, %v707
    %v714 = vpack.c.bf16 %v711, %v708
    %718 = vrot.lane.b32.xlu0 %v712, 112
    %v719 = vpop.permute.xlu0 %718
    %720 = vrot.lane.b32.xlu0 %v713, 112
    %v721 = vpop.permute.xlu0 %720
    %722 = vrot.lane.b32.xlu0 %v714, 112
    %v723 = vpop.permute.xlu0 %722
    %v724 = vsel %vm452, %v719, %v721
    %v725 = vsel %vm452, %v721, %v723
    %728 = vst [vmem:[#allocation3 + $0xf0] sm:$0xff] %v724
    %729 = vst [vmem:[#allocation3 + $0xf8] sm:$0xff] %v725
    %v730 = vld [vmem:[#allocation2 + $0x28] sm:$0xff]
    %v731 = vld [vmem:[#allocation2 + $0x30] sm:$0xff]
    %v732 = vld [vmem:[#allocation2 + $0x38] sm:$0xff]
    %v733 = vld [vmem:[#allocation2 + $0x68] sm:$0xff]
    %v734 = vld [vmem:[#allocation2 + $0x70] sm:$0xff]
    %v735 = vld [vmem:[#allocation2 + $0x78] sm:$0xff]
    %v736 = vmul.f32 %v730, %v475
    %v737 = vmul.f32 %v731, %v479
    %v738 = vmul.f32 %v732, %v477
    %v739 = vmul.f32 %v733, %v475
    %v740 = vmul.f32 %v734, %v479
    %v741 = vmul.f32 %v735, %v477
    %v742 = vpack.c.bf16 %v739, %v736
    %v743 = vpack.c.bf16 %v740, %v737
    %v744 = vpack.c.bf16 %v741, %v738
    %748 = vrot.lane.b32.xlu0 %v742, 111
    %v749 = vpop.permute.xlu0 %748
    %750 = vrot.lane.b32.xlu0 %v743, 111
    %v751 = vpop.permute.xlu0 %750
    %752 = vrot.lane.b32.xlu0 %v744, 111
    %v753 = vpop.permute.xlu0 %752
    %v754 = vsel %vm501, %v749, %v751
    %v755 = vsel %vm501, %v751, %v753
    %758 = vst [vmem:[#allocation3 + $0x110] sm:$0xff] %v754
    %759 = vst [vmem:[#allocation3 + $0x118] sm:$0xff] %v755
    %v760 = vld [vmem:[%s2] sm:$0xff]
    %v761 = vld [vmem:[%s2 + $0x8] sm:$0xff]
    %v762 = vld [vmem:[#allocation3] sm:$0xff]
    %v763 = vld [vmem:[#allocation3 + $0x8] sm:$0xff]
    %v764 = vld [vmem:[#allocation3 + $0x10] sm:$0xff]
    %v765 = vld [vmem:[#allocation3 + $0x18] sm:$0xff]
    %v766 = vld [vmem:[#allocation3 + $0x20] sm:$0xff]
    %v767 = vld [vmem:[#allocation3 + $0x28] sm:$0xff]
    %v768 = vld [vmem:[#allocation3 + $0x30] sm:$0xff]
    %v769 = vld [vmem:[#allocation3 + $0x38] sm:$0xff]
    %v770 = vld [vmem:[#allocation3 + $0x40] sm:$0xff]
    %v771 = vld [vmem:[#allocation3 + $0x48] sm:$0xff]
    %v772 = vld [vmem:[#allocation3 + $0x50] sm:$0xff]
    %v773 = vld [vmem:[#allocation3 + $0x58] sm:$0xff]
    %v774 = vld [vmem:[#allocation3 + $0x60] sm:$0xff]
    %v775 = vld [vmem:[#allocation3 + $0x68] sm:$0xff]
    %v776 = vld [vmem:[#allocation3 + $0x70] sm:$0xff]
    %v777 = vld [vmem:[#allocation3 + $0x78] sm:$0xff]
    %v778 = vld [vmem:[#allocation3 + $0x80] sm:$0xff]
    %v779 = vld [vmem:[#allocation3 + $0x88] sm:$0xff]
    %v780 = vld [vmem:[#allocation3 + $0x90] sm:$0xff]
    %v781 = vld [vmem:[#allocation3 + $0x98] sm:$0xff]
    %v782 = vld [vmem:[#allocation3 + $0xa0] sm:$0xff]
    %v783 = vld [vmem:[#allocation3 + $0xa8] sm:$0xff]
    %v784 = vld [vmem:[#allocation3 + $0xb0] sm:$0xff]
    %v785 = vld [vmem:[#allocation3 + $0xb8] sm:$0xff]
    %v786 = vld [vmem:[#allocation3 + $0xc0] sm:$0xff]
    %v787 = vld [vmem:[#allocation3 + $0xc8] sm:$0xff]
    %v788 = vld [vmem:[#allocation3 + $0xd0] sm:$0xff]
    %v789 = vld [vmem:[#allocation3 + $0xd8] sm:$0xff]
    %v790 = vld [vmem:[#allocation3 + $0xe0] sm:$0xff]
    %v791 = vld [vmem:[#allocation3 + $0xe8] sm:$0xff]
    %v792 = vld [vmem:[#allocation3 + $0xf0] sm:$0xff]
    %v793 = vld [vmem:[#allocation3 + $0xf8] sm:$0xff]
    %v794 = vld [vmem:[#allocation3 + $0x100] sm:$0xff]
    %v795 = vld [vmem:[#allocation3 + $0x108] sm:$0xff]
    %v796 = vld [vmem:[#allocation3 + $0x110] sm:$0xff]
    %v797 = vld [vmem:[#allocation3 + $0x118] sm:$0xff]
    %v798 = vld [vmem:[%s3] sm:$0xff]
    %v799 = vld [vmem:[%s3 + $0x8] sm:$0xff]
    %801 = vset.pattern.permute.xlu0 0
    %802 = vperm.xlu0 %801, %v798
    %v803 = vpop.permute.xlu0 %802
    %806 = vset.pattern.permute.xlu0 0
    %807 = vperm.xlu0 %806, %v799
    %v808 = vpop.permute.xlu0 %807
    %v812 = vunpack.c.l.b16 %v760
    %v813 = vunpack.c.h.b16 %v760
    %v814 = vunpack.c.l.b16 %v761
    %v815 = vunpack.c.h.b16 %v761
    %v816 = vpack.c.b16 %v814, %v812
    %v817 = vpack.c.b16 %v815, %v813
    %v820 = vsel %vm429, %v817, 0
    %822 = vmatprep.subr.bf16.mxu0 %v763
    %823 = vmatpush1.bf16.msra.mxu0 %v762
    %824 = vmatprep.subr.bf16.mxu0 %v767
    %825 = vmatpush1.bf16.msra.mxu0 %v766
    %826 = vmatprep.subr.bf16.mxu0 %v771
    %827 = vmatpush1.bf16.msra.mxu0 %v770
    %828 = vmatprep.subr.bf16.mxu0 %v775
    %829 = vmatpush1.bf16.msra.mxu0 %v774
    %830 = vmatprep.subr.bf16.mxu0 %v779
    %831 = vmatpush1.bf16.msra.mxu0 %v778
    %832 = vmatprep.subr.bf16.mxu0 %v783
    %833 = vmatpush1.bf16.msra.mxu0 %v782
    %834 = vmatprep.subr.bf16.mxu0 %v787
    %835 = vmatpush1.bf16.msra.mxu0 %v786
    %836 = vmatprep.subr.bf16.mxu0 %v791
    %837 = vmatpush1.bf16.msra.mxu0 %v790
    %838 = vmatprep.subr.bf16.mxu0 %v795
    %839 = vmatpush1.bf16.msra.mxu0 %v794
    %840 = vmatprep.subr.bf16.mxu0 0
    %841 = vmatpush1.bf16.msra.mxu0 0
    %842 = vmatprep.subr.bf16.mxu0 0
    %843 = vmatpush1.bf16.msra.mxu0 0
    %844 = vmatprep.subr.bf16.mxu0 0
    %845 = vmatpush1.bf16.msra.mxu0 0
    %846 = vmatprep.subr.bf16.mxu0 0
    %847 = vmatpush1.bf16.msra.mxu0 0
    %848 = vmatprep.subr.bf16.mxu0 0
    %849 = vmatpush1.bf16.msra.mxu0 0
    %850 = vmatprep.subr.bf16.mxu0 0
    %851 = vmatpush1.bf16.msra.mxu0 0
    %852 = vmatprep.subr.bf16.mxu0 0
    %853 = vmatpush1.bf16.msra.mxu0 0
    %854 = vmatprep.mubr.bf16.mxu0 %v820
    %855 = vmatmul.mubr.bf16.gmra.mrb[0].mxu0 %v816
    %v856 = vpop.f32.mrb[0].mxu0
    %v857 = vadd.f32 %v803, %v856
    %v858 = vpop.f32.mrb[0].mxu0
    %v859 = vadd.f32 %v803, %v858
    %v860 = vpop.f32.mrb[0].mxu0
    %v861 = vadd.f32 %v808, %v860
    %v862 = vpop.f32.mrb[0].mxu0
    %v863 = vadd.f32 %v808, %v862
    %864 = vdwg.mxu0
    %865 = vmatprep.subr.bf16.mxu0 %v765
    %866 = vmatpush1.bf16.msra.mxu0 %v764
    %867 = vmatprep.subr.bf16.mxu0 %v769
    %868 = vmatpush1.bf16.msra.mxu0 %v768
    %869 = vmatprep.subr.bf16.mxu0 %v773
    %870 = vmatpush1.bf16.msra.mxu0 %v772
    %871 = vmatprep.subr.bf16.mxu0 %v777
    %872 = vmatpush1.bf16.msra.mxu0 %v776
    %873 = vmatprep.subr.bf16.mxu0 %v781
    %874 = vmatpush1.bf16.msra.mxu0 %v780
    %875 = vmatprep.subr.bf16.mxu0 %v785
    %876 = vmatpush1.bf16.msra.mxu0 %v784
    %877 = vmatprep.subr.bf16.mxu0 %v789
    %878 = vmatpush1.bf16.msra.mxu0 %v788
    %879 = vmatprep.subr.bf16.mxu0 %v793
    %880 = vmatpush1.bf16.msra.mxu0 %v792
    %881 = vmatprep.subr.bf16.mxu0 %v797
    %882 = vmatpush1.bf16.msra.mxu0 %v796
    %883 = vmatprep.subr.bf16.mxu0 0
    %884 = vmatpush1.bf16.msra.mxu0 0
    %885 = vmatprep.subr.bf16.mxu0 0
    %886 = vmatpush1.bf16.msra.mxu0 0
    %887 = vmatprep.subr.bf16.mxu0 0
    %888 = vmatpush1.bf16.msra.mxu0 0
    %889 = vmatprep.subr.bf16.mxu0 0
    %890 = vmatpush1.bf16.msra.mxu0 0
    %891 = vmatprep.subr.bf16.mxu0 0
    %892 = vmatpush1.bf16.msra.mxu0 0
    %893 = vmatprep.subr.bf16.mxu0 0
    %894 = vmatpush1.bf16.msra.mxu0 0
    %895 = vmatprep.subr.bf16.mxu0 0
    %896 = vmatpush1.bf16.msra.mxu0 0
    %897 = vmatprep.mubr.bf16.mxu0 %v820
    %898 = vmatmul.mubr.bf16.gmra.mrb[0].mxu0 %v816
    %v899 = vpop.f32.mrb[0].mxu0
    %v900 = vadd.f32 %v803, %v899
    %v901 = vpop.f32.mrb[0].mxu0
    %v902 = vadd.f32 %v803, %v901
    %v903 = vpop.f32.mrb[0].mxu0
    %v904 = vadd.f32 %v808, %v903
    %v905 = vpop.f32.mrb[0].mxu0
    %v906 = vadd.f32 %v808, %v905
    %907 = vdwg.mxu0
    %v908 = vmax.f32 %v857, 0.0
    %v909 = vmax.f32 %v859, 0.0
    %v910 = vmax.f32 %v900, 0.0
    %v911 = vmax.f32 %v902, 0.0
    %v912 = vmax.f32 %v861, 0.0
    %v913 = vmax.f32 %v863, 0.0
    %v914 = vmax.f32 %v904, 0.0
    %v915 = vmax.f32 %v906, 0.0
    %916 = vst [vmem:[#allocation2 + $0x8] sm:$0xff] %v908
    %917 = vst [vmem:[#allocation2 + $0x10] sm:$0xff] %v909
    %918 = vst [vmem:[#allocation2 + $0x48] sm:$0xff] %v912
    %919 = vst [vmem:[#allocation2 + $0x50] sm:$0xff] %v913
    %920 = vst [vmem:[#allocation2 + $0x28] sm:$0xff] %v910
    %921 = vst [vmem:[#allocation2 + $0x30] sm:$0xff] %v911
    %922 = vst [vmem:[#allocation2 + $0x68] sm:$0xff] %v914
    %923 = vst [vmem:[#allocation2 + $0x70] sm:$0xff] %v915
    %v924 = vld [vmem:[#allocation2] sm:$0xff]
    %v925 = vld [vmem:[#allocation2 + $0x8] sm:$0xff]
    %v926 = vld [vmem:[#allocation2 + $0x10] sm:$0xff]
    %v927 = vld [vmem:[#allocation2 + $0x40] sm:$0xff]
    %v928 = vld [vmem:[#allocation2 + $0x48] sm:$0xff]
    %v929 = vld [vmem:[#allocation2 + $0x50] sm:$0xff]
    %v930 = vmul.f32 %v924, %v109
    %v931 = vmul.f32 %v925, %v113
    %v932 = vmul.f32 %v926, %v111
    %v933 = vmul.f32 %v927, %v109
    %v934 = vmul.f32 %v928, %v113
    %v935 = vmul.f32 %v929, %v111
    %v936 = vpack.c.bf16 %v933, %v930
    %v937 = vpack.c.bf16 %v934, %v931
    %v938 = vpack.c.bf16 %v935, %v932
    %942 = vrot.lane.b32.xlu0 %v936, 17
    %v943 = vpop.permute.xlu0 %942
    %944 = vrot.lane.b32.xlu0 %v937, 17
    %v945 = vpop.permute.xlu0 %944
    %946 = vrot.lane.b32.xlu0 %v938, 17
    %v947 = vpop.permute.xlu0 %946
    %v948 = vsel %vm135, %v943, %v945
    %v949 = vsel %vm135, %v945, %v947
    %952 = vst [vmem:[#allocation3] sm:$0xff] %v948
    %953 = vst [vmem:[#allocation3 + $0x8] sm:$0xff] %v949
    %v954 = vld [vmem:[#allocation2] sm:$0xff]
    %v955 = vld [vmem:[#allocation2 + $0x8] sm:$0xff]
    %v956 = vld [vmem:[#allocation2 + $0x10] sm:$0xff]
    %v957 = vld [vmem:[#allocation2 + $0x40] sm:$0xff]
    %v958 = vld [vmem:[#allocation2 + $0x48] sm:$0xff]
    %v959 = vld [vmem:[#allocation2 + $0x50] sm:$0xff]
    %v960 = vmul.f32 %v954, %v158
    %v961 = vmul.f32 %v955, %v162
    %v962 = vmul.f32 %v956, %v160
    %v963 = vmul.f32 %v957, %v158
    %v964 = vmul.f32 %v958, %v162
    %v965 = vmul.f32 %v959, %v160
    %v966 = vpack.c.bf16 %v963, %v960
    %v967 = vpack.c.bf16 %v964, %v961
    %v968 = vpack.c.bf16 %v965, %v962
    %972 = vrot.lane.b32.xlu0 %v966, 16
    %v973 = vpop.permute.xlu0 %972
    %974 = vrot.lane.b32.xlu0 %v967, 16
    %v975 = vpop.permute.xlu0 %974
    %976 = vrot.lane.b32.xlu0 %v968, 16
    %v977 = vpop.permute.xlu0 %976
    %v978 = vsel %vm184, %v973, %v975
    %v979 = vsel %vm184, %v975, %v977
    %982 = vst [vmem:[#allocation3 + $0x20] sm:$0xff] %v978
    %983 = vst [vmem:[#allocation3 + $0x28] sm:$0xff] %v979
    %v984 = vld [vmem:[#allocation2] sm:$0xff]
    %v985 = vld [vmem:[#allocation2 + $0x8] sm:$0xff]
    %v986 = vld [vmem:[#allocation2 + $0x10] sm:$0xff]
    %v987 = vld [vmem:[#allocation2 + $0x40] sm:$0xff]
    %v988 = vld [vmem:[#allocation2 + $0x48] sm:$0xff]
    %v989 = vld [vmem:[#allocation2 + $0x50] sm:$0xff]
    %v990 = vmul.f32 %v984, %v207
    %v991 = vmul.f32 %v985, %v211
    %v992 = vmul.f32 %v986, %v209
    %v993 = vmul.f32 %v987, %v207
    %v994 = vmul.f32 %v988, %v211
    %v995 = vmul.f32 %v989, %v209
    %v996 = vpack.c.bf16 %v993, %v990
    %v997 = vpack.c.bf16 %v994, %v991
    %v998 = vpack.c.bf16 %v995, %v992
    %1002 = vrot.lane.b32.xlu0 %v996, 15
    %v1003 = vpop.permute.xlu0 %1002
    %1004 = vrot.lane.b32.xlu0 %v997, 15
    %v1005 = vpop.permute.xlu0 %1004
    %1006 = vrot.lane.b32.xlu0 %v998, 15
    %v1007 = vpop.permute.xlu0 %1006
    %v1008 = vsel %vm233, %v1003, %v1005
    %v1009 = vsel %vm233, %v1005, %v1007
    %1012 = vst [vmem:[#allocation3 + $0x40] sm:$0xff] %v1008
    %1013 = vst [vmem:[#allocation3 + $0x48] sm:$0xff] %v1009
    %v1014 = vld [vmem:[#allocation2] sm:$0xff]
    %v1015 = vld [vmem:[#allocation2 + $0x8] sm:$0xff]
    %v1016 = vld [vmem:[#allocation2 + $0x10] sm:$0xff]
    %v1017 = vld [vmem:[#allocation2 + $0x40] sm:$0xff]
    %v1018 = vld [vmem:[#allocation2 + $0x48] sm:$0xff]
    %v1019 = vld [vmem:[#allocation2 + $0x50] sm:$0xff]
    %v1020 = vmul.f32 %v1014, %v256
    %v1021 = vmul.f32 %v1015, %v260
    %v1022 = vmul.f32 %v1016, %v258
    %v1023 = vmul.f32 %v1017, %v256
    %v1024 = vmul.f32 %v1018, %v260
    %v1025 = vmul.f32 %v1019, %v258
    %v1026 = vpack.c.bf16 %v1023, %v1020
    %v1027 = vpack.c.bf16 %v1024, %v1021
    %v1028 = vpack.c.bf16 %v1025, %v1022
    %1032 = vrot.lane.b32.xlu0 %v1026, 1
    %v1033 = vpop.permute.xlu0 %1032
    %1034 = vrot.lane.b32.xlu0 %v1027, 1
    %v1035 = vpop.permute.xlu0 %1034
    %1036 = vrot.lane.b32.xlu0 %v1028, 1
    %v1037 = vpop.permute.xlu0 %1036
    %v1038 = vsel %vm282, %v1033, %v1035
    %v1039 = vsel %vm282, %v1035, %v1037
    %1042 = vst [vmem:[#allocation3 + $0x60] sm:$0xff] %v1038
    %1043 = vst [vmem:[#allocation3 + $0x68] sm:$0xff] %v1039
    %v1044 = vld [vmem:[#allocation2 + $0x8] sm:$0xff]
    %v1045 = vld [vmem:[#allocation2 + $0x10] sm:$0xff]
    %v1046 = vld [vmem:[#allocation2 + $0x48] sm:$0xff]
    %v1047 = vld [vmem:[#allocation2 + $0x50] sm:$0xff]
    %v1048 = vmul.f32 %v1044, %v297
    %v1049 = vmul.f32 %v1045, %v301
    %v1050 = vmul.f32 %v1046, %v297
    %v1051 = vmul.f32 %v1047, %v301
    %v1052 = vpack.c.bf16 %v1050, %v1048
    %v1053 = vpack.c.bf16 %v1051, %v1049
    %1054 = vst [vmem:[#allocation3 + $0x80] sm:$0xff] %v1052
    %1055 = vst [vmem:[#allocation3 + $0x88] sm:$0xff] %v1053
    %v1056 = vld [vmem:[#allocation2 + $0x8] sm:$0xff]
    %v1057 = vld [vmem:[#allocation2 + $0x10] sm:$0xff]
    %v1058 = vld [vmem:[#allocation2 + $0x18] sm:$0xff]
    %v1059 = vld [vmem:[#allocation2 + $0x48] sm:$0xff]
    %v1060 = vld [vmem:[#allocation2 + $0x50] sm:$0xff]
    %v1061 = vld [vmem:[#allocation2 + $0x58] sm:$0xff]
    %v1062 = vmul.f32 %v1056, %v328
    %v1063 = vmul.f32 %v1057, %v332
    %v1064 = vmul.f32 %v1058, %v330
    %v1065 = vmul.f32 %v1059, %v328
    %v1066 = vmul.f32 %v1060, %v332
    %v1067 = vmul.f32 %v1061, %v330
    %v1068 = vpack.c.bf16 %v1065, %v1062
    %v1069 = vpack.c.bf16 %v1066, %v1063
    %v1070 = vpack.c.bf16 %v1067, %v1064
    %1074 = vrot.lane.b32.xlu0 %v1068, 127
    %v1075 = vpop.permute.xlu0 %1074
    %1076 = vrot.lane.b32.xlu0 %v1069, 127
    %v1077 = vpop.permute.xlu0 %1076
    %1078 = vrot.lane.b32.xlu0 %v1070, 127
    %v1079 = vpop.permute.xlu0 %1078
    %v1080 = vsel %vm354, %v1075, %v1077
    %v1081 = vsel %vm354, %v1077, %v1079
    %1084 = vst [vmem:[#allocation3 + $0xa0] sm:$0xff] %v1080
    %1085 = vst [vmem:[#allocation3 + $0xa8] sm:$0xff] %v1081
    %v1086 = vld [vmem:[#allocation2 + $0x8] sm:$0xff]
    %v1087 = vld [vmem:[#allocation2 + $0x10] sm:$0xff]
    %v1088 = vld [vmem:[#allocation2 + $0x18] sm:$0xff]
    %v1089 = vld [vmem:[#allocation2 + $0x48] sm:$0xff]
    %v1090 = vld [vmem:[#allocation2 + $0x50] sm:$0xff]
    %v1091 = vld [vmem:[#allocation2 + $0x58] sm:$0xff]
    %v1092 = vmul.f32 %v1086, %v377
    %v1093 = vmul.f32 %v1087, %v381
    %v1094 = vmul.f32 %v1088, %v379
    %v1095 = vmul.f32 %v1089, %v377
    %v1096 = vmul.f32 %v1090, %v381
    %v1097 = vmul.f32 %v1091, %v379
    %v1098 = vpack.c.bf16 %v1095, %v1092
    %v1099 = vpack.c.bf16 %v1096, %v1093
    %v1100 = vpack.c.bf16 %v1097, %v1094
    %1104 = vrot.lane.b32.xlu0 %v1098, 113
    %v1105 = vpop.permute.xlu0 %1104
    %1106 = vrot.lane.b32.xlu0 %v1099, 113
    %v1107 = vpop.permute.xlu0 %1106
    %1108 = vrot.lane.b32.xlu0 %v1100, 113
    %v1109 = vpop.permute.xlu0 %1108
    %v1110 = vsel %vm403, %v1105, %v1107
    %v1111 = vsel %vm403, %v1107, %v1109
    %1114 = vst [vmem:[#allocation3 + $0xc0] sm:$0xff] %v1110
    %1115 = vst [vmem:[#allocation3 + $0xc8] sm:$0xff] %v1111
    %v1116 = vld [vmem:[#allocation2 + $0x8] sm:$0xff]
    %v1117 = vld [vmem:[#allocation2 + $0x10] sm:$0xff]
    %v1118 = vld [vmem:[#allocation2 + $0x18] sm:$0xff]
    %v1119 = vld [vmem:[#allocation2 + $0x48] sm:$0xff]
    %v1120 = vld [vmem:[#allocation2 + $0x50] sm:$0xff]
    %v1121 = vld [vmem:[#allocation2 + $0x58] sm:$0xff]
    %v1122 = vmul.f32 %v1116, %v426
    %v1123 = vmul.f32 %v1117, %v430
    %v1124 = vmul.f32 %v1118, %v428
    %v1125 = vmul.f32 %v1119, %v426
    %v1126 = vmul.f32 %v1120, %v430
    %v1127 = vmul.f32 %v1121, %v428
    %v1128 = vpack.c.bf16 %v1125, %v1122
    %v1129 = vpack.c.bf16 %v1126, %v1123
    %v1130 = vpack.c.bf16 %v1127, %v1124
    %1134 = vrot.lane.b32.xlu0 %v1128, 112
    %v1135 = vpop.permute.xlu0 %1134
    %1136 = vrot.lane.b32.xlu0 %v1129, 112
    %v1137 = vpop.permute.xlu0 %1136
    %1138 = vrot.lane.b32.xlu0 %v1130, 112
    %v1139 = vpop.permute.xlu0 %1138
    %v1140 = vsel %vm452, %v1135, %v1137
    %v1141 = vsel %vm452, %v1137, %v1139
    %1144 = vst [vmem:[#allocation3 + $0xe0] sm:$0xff] %v1140
    %1145 = vst [vmem:[#allocation3 + $0xe8] sm:$0xff] %v1141
    %v1146 = vld [vmem:[#allocation2 + $0x8] sm:$0xff]
    %v1147 = vld [vmem:[#allocation2 + $0x10] sm:$0xff]
    %v1148 = vld [vmem:[#allocation2 + $0x18] sm:$0xff]
    %v1149 = vld [vmem:[#allocation2 + $0x48] sm:$0xff]
    %v1150 = vld [vmem:[#allocation2 + $0x50] sm:$0xff]
    %v1151 = vld [vmem:[#allocation2 + $0x58] sm:$0xff]
    %v1152 = vmul.f32 %v1146, %v475
    %v1153 = vmul.f32 %v1147, %v479
    %v1154 = vmul.f32 %v1148, %v477
    %v1155 = vmul.f32 %v1149, %v475
    %v1156 = vmul.f32 %v1150, %v479
    %v1157 = vmul.f32 %v1151, %v477
    %v1158 = vpack.c.bf16 %v1155, %v1152
    %v1159 = vpack.c.bf16 %v1156, %v1153
    %v1160 = vpack.c.bf16 %v1157, %v1154
    %1164 = vrot.lane.b32.xlu0 %v1158, 111
    %v1165 = vpop.permute.xlu0 %1164
    %1166 = vrot.lane.b32.xlu0 %v1159, 111
    %v1167 = vpop.permute.xlu0 %1166
    %1168 = vrot.lane.b32.xlu0 %v1160, 111
    %v1169 = vpop.permute.xlu0 %1168
    %v1170 = vsel %vm501, %v1165, %v1167
    %v1171 = vsel %vm501, %v1167, %v1169
    %1174 = vst [vmem:[#allocation3 + $0x100] sm:$0xff] %v1170
    %1175 = vst [vmem:[#allocation3 + $0x108] sm:$0xff] %v1171
    %v1176 = vld [vmem:[#allocation2 + $0x20] sm:$0xff]
    %v1177 = vld [vmem:[#allocation2 + $0x28] sm:$0xff]
    %v1178 = vld [vmem:[#allocation2 + $0x30] sm:$0xff]
    %v1179 = vld [vmem:[#allocation2 + $0x60] sm:$0xff]
    %v1180 = vld [vmem:[#allocation2 + $0x68] sm:$0xff]
    %v1181 = vld [vmem:[#allocation2 + $0x70] sm:$0xff]
    %v1182 = vmul.f32 %v1176, %v109
    %v1183 = vmul.f32 %v1177, %v113
    %v1184 = vmul.f32 %v1178, %v111
    %v1185 = vmul.f32 %v1179, %v109
    %v1186 = vmul.f32 %v1180, %v113
    %v1187 = vmul.f32 %v1181, %v111
    %v1188 = vpack.c.bf16 %v1185, %v1182
    %v1189 = vpack.c.bf16 %v1186, %v1183
    %v1190 = vpack.c.bf16 %v1187, %v1184
    %1194 = vrot.lane.b32.xlu0 %v1188, 17
    %v1195 = vpop.permute.xlu0 %1194
    %1196 = vrot.lane.b32.xlu0 %v1189, 17
    %v1197 = vpop.permute.xlu0 %1196
    %1198 = vrot.lane.b32.xlu0 %v1190, 17
    %v1199 = vpop.permute.xlu0 %1198
    %v1200 = vsel %vm135, %v1195, %v1197
    %v1201 = vsel %vm135, %v1197, %v1199
    %1204 = vst [vmem:[#allocation3 + $0x10] sm:$0xff] %v1200
    %1205 = vst [vmem:[#allocation3 + $0x18] sm:$0xff] %v1201
    %v1206 = vld [vmem:[#allocation2 + $0x20] sm:$0xff]
    %v1207 = vld [vmem:[#allocation2 + $0x28] sm:$0xff]
    %v1208 = vld [vmem:[#allocation2 + $0x30] sm:$0xff]
    %v1209 = vld [vmem:[#allocation2 + $0x60] sm:$0xff]
    %v1210 = vld [vmem:[#allocation2 + $0x68] sm:$0xff]
    %v1211 = vld [vmem:[#allocation2 + $0x70] sm:$0xff]
    %v1212 = vmul.f32 %v1206, %v158
    %v1213 = vmul.f32 %v1207, %v162
    %v1214 = vmul.f32 %v1208, %v160
    %v1215 = vmul.f32 %v1209, %v158
    %v1216 = vmul.f32 %v1210, %v162
    %v1217 = vmul.f32 %v1211, %v160
    %v1218 = vpack.c.bf16 %v1215, %v1212
    %v1219 = vpack.c.bf16 %v1216, %v1213
    %v1220 = vpack.c.bf16 %v1217, %v1214
    %1224 = vrot.lane.b32.xlu0 %v1218, 16
    %v1225 = vpop.permute.xlu0 %1224
    %1226 = vrot.lane.b32.xlu0 %v1219, 16
    %v1227 = vpop.permute.xlu0 %1226
    %1228 = vrot.lane.b32.xlu0 %v1220, 16
    %v1229 = vpop.permute.xlu0 %1228
    %v1230 = vsel %vm184, %v1225, %v1227
    %v1231 = vsel %vm184, %v1227, %v1229
    %1234 = vst [vmem:[#allocation3 + $0x30] sm:$0xff] %v1230
    %1235 = vst [vmem:[#allocation3 + $0x38] sm:$0xff] %v1231
    %v1236 = vld [vmem:[#allocation2 + $0x20] sm:$0xff]
    %v1237 = vld [vmem:[#allocation2 + $0x28] sm:$0xff]
    %v1238 = vld [vmem:[#allocation2 + $0x30] sm:$0xff]
    %v1239 = vld [vmem:[#allocation2 + $0x60] sm:$0xff]
    %v1240 = vld [vmem:[#allocation2 + $0x68] sm:$0xff]
    %v1241 = vld [vmem:[#allocation2 + $0x70] sm:$0xff]
    %v1242 = vmul.f32 %v1236, %v207
    %v1243 = vmul.f32 %v1237, %v211
    %v1244 = vmul.f32 %v1238, %v209
    %v1245 = vmul.f32 %v1239, %v207
    %v1246 = vmul.f32 %v1240, %v211
    %v1247 = vmul.f32 %v1241, %v209
    %v1248 = vpack.c.bf16 %v1245, %v1242
    %v1249 = vpack.c.bf16 %v1246, %v1243
    %v1250 = vpack.c.bf16 %v1247, %v1244
    %1254 = vrot.lane.b32.xlu0 %v1248, 15
    %v1255 = vpop.permute.xlu0 %1254
    %1256 = vrot.lane.b32.xlu0 %v1249, 15
    %v1257 = vpop.permute.xlu0 %1256
    %1258 = vrot.lane.b32.xlu0 %v1250, 15
    %v1259 = vpop.permute.xlu0 %1258
    %v1260 = vsel %vm233, %v1255, %v1257
    %v1261 = vsel %vm233, %v1257, %v1259
    %1264 = vst [vmem:[#allocation3 + $0x50] sm:$0xff] %v1260
    %1265 = vst [vmem:[#allocation3 + $0x58] sm:$0xff] %v1261
    %v1266 = vld [vmem:[#allocation2 + $0x20] sm:$0xff]
    %v1267 = vld [vmem:[#allocation2 + $0x28] sm:$0xff]
    %v1268 = vld [vmem:[#allocation2 + $0x30] sm:$0xff]
    %v1269 = vld [vmem:[#allocation2 + $0x60] sm:$0xff]
    %v1270 = vld [vmem:[#allocation2 + $0x68] sm:$0xff]
    %v1271 = vld [vmem:[#allocation2 + $0x70] sm:$0xff]
    %v1272 = vmul.f32 %v1266, %v256
    %v1273 = vmul.f32 %v1267, %v260
    %v1274 = vmul.f32 %v1268, %v258
    %v1275 = vmul.f32 %v1269, %v256
    %v1276 = vmul.f32 %v1270, %v260
    %v1277 = vmul.f32 %v1271, %v258
    %v1278 = vpack.c.bf16 %v1275, %v1272
    %v1279 = vpack.c.bf16 %v1276, %v1273
    %v1280 = vpack.c.bf16 %v1277, %v1274
    %1284 = vrot.lane.b32.xlu0 %v1278, 1
    %v1285 = vpop.permute.xlu0 %1284
    %1286 = vrot.lane.b32.xlu0 %v1279, 1
    %v1287 = vpop.permute.xlu0 %1286
    %1288 = vrot.lane.b32.xlu0 %v1280, 1
    %v1289 = vpop.permute.xlu0 %1288
    %v1290 = vsel %vm282, %v1285, %v1287
    %v1291 = vsel %vm282, %v1287, %v1289
    %1294 = vst [vmem:[#allocation3 + $0x70] sm:$0xff] %v1290
    %1295 = vst [vmem:[#allocation3 + $0x78] sm:$0xff] %v1291
    %v1296 = vld [vmem:[#allocation2 + $0x28] sm:$0xff]
    %v1297 = vld [vmem:[#allocation2 + $0x30] sm:$0xff]
    %v1298 = vld [vmem:[#allocation2 + $0x68] sm:$0xff]
    %v1299 = vld [vmem:[#allocation2 + $0x70] sm:$0xff]
    %v1300 = vmul.f32 %v1296, %v297
    %v1301 = vmul.f32 %v1297, %v301
    %v1302 = vmul.f32 %v1298, %v297
    %v1303 = vmul.f32 %v1299, %v301
    %v1304 = vpack.c.bf16 %v1302, %v1300
    %v1305 = vpack.c.bf16 %v1303, %v1301
    %1306 = vst [vmem:[#allocation3 + $0x90] sm:$0xff] %v1304
    %1307 = vst [vmem:[#allocation3 + $0x98] sm:$0xff] %v1305
    %v1308 = vld [vmem:[#allocation2 + $0x28] sm:$0xff]
    %v1309 = vld [vmem:[#allocation2 + $0x30] sm:$0xff]
    %v1310 = vld [vmem:[#allocation2 + $0x38] sm:$0xff]
    %v1311 = vld [vmem:[#allocation2 + $0x68] sm:$0xff]
    %v1312 = vld [vmem:[#allocation2 + $0x70] sm:$0xff]
    %v1313 = vld [vmem:[#allocation2 + $0x78] sm:$0xff]
    %v1314 = vmul.f32 %v1308, %v328
    %v1315 = vmul.f32 %v1309, %v332
    %v1316 = vmul.f32 %v1310, %v330
    %v1317 = vmul.f32 %v1311, %v328
    %v1318 = vmul.f32 %v1312, %v332
    %v1319 = vmul.f32 %v1313, %v330
    %v1320 = vpack.c.bf16 %v1317, %v1314
    %v1321 = vpack.c.bf16 %v1318, %v1315
    %v1322 = vpack.c.bf16 %v1319, %v1316
    %1326 = vrot.lane.b32.xlu0 %v1320, 127
    %v1327 = vpop.permute.xlu0 %1326
    %1328 = vrot.lane.b32.xlu0 %v1321, 127
    %v1329 = vpop.permute.xlu0 %1328
    %1330 = vrot.lane.b32.xlu0 %v1322, 127
    %v1331 = vpop.permute.xlu0 %1330
    %v1332 = vsel %vm354, %v1327, %v1329
    %v1333 = vsel %vm354, %v1329, %v1331
    %1336 = vst [vmem:[#allocation3 + $0xb0] sm:$0xff] %v1332
    %1337 = vst [vmem:[#allocation3 + $0xb8] sm:$0xff] %v1333
    %v1338 = vld [vmem:[#allocation2 + $0x28] sm:$0xff]
    %v1339 = vld [vmem:[#allocation2 + $0x30] sm:$0xff]
    %v1340 = vld [vmem:[#allocation2 + $0x38] sm:$0xff]
    %v1341 = vld [vmem:[#allocation2 + $0x68] sm:$0xff]
    %v1342 = vld [vmem:[#allocation2 + $0x70] sm:$0xff]
    %v1343 = vld [vmem:[#allocation2 + $0x78] sm:$0xff]
    %v1344 = vmul.f32 %v1338, %v377
    %v1345 = vmul.f32 %v1339, %v381
    %v1346 = vmul.f32 %v1340, %v379
    %v1347 = vmul.f32 %v1341, %v377
    %v1348 = vmul.f32 %v1342, %v381
    %v1349 = vmul.f32 %v1343, %v379
    %v1350 = vpack.c.bf16 %v1347, %v1344
    %v1351 = vpack.c.bf16 %v1348, %v1345
    %v1352 = vpack.c.bf16 %v1349, %v1346
    %1356 = vrot.lane.b32.xlu0 %v1350, 113
    %v1357 = vpop.permute.xlu0 %1356
    %1358 = vrot.lane.b32.xlu0 %v1351, 113
    %v1359 = vpop.permute.xlu0 %1358
    %1360 = vrot.lane.b32.xlu0 %v1352, 113
    %v1361 = vpop.permute.xlu0 %1360
    %v1362 = vsel %vm403, %v1357, %v1359
    %v1363 = vsel %vm403, %v1359, %v1361
    %1366 = vst [vmem:[#allocation3 + $0xd0] sm:$0xff] %v1362
    %1367 = vst [vmem:[#allocation3 + $0xd8] sm:$0xff] %v1363
    %v1368 = vld [vmem:[#allocation2 + $0x28] sm:$0xff]
    %v1369 = vld [vmem:[#allocation2 + $0x30] sm:$0xff]
    %v1370 = vld [vmem:[#allocation2 + $0x38] sm:$0xff]
    %v1371 = vld [vmem:[#allocation2 + $0x68] sm:$0xff]
    %v1372 = vld [vmem:[#allocation2 + $0x70] sm:$0xff]
    %v1373 = vld [vmem:[#allocation2 + $0x78] sm:$0xff]
    %v1374 = vmul.f32 %v1368, %v426
    %v1375 = vmul.f32 %v1369, %v430
    %v1376 = vmul.f32 %v1370, %v428
    %v1377 = vmul.f32 %v1371, %v426
    %v1378 = vmul.f32 %v1372, %v430
    %v1379 = vmul.f32 %v1373, %v428
    %v1380 = vpack.c.bf16 %v1377, %v1374
    %v1381 = vpack.c.bf16 %v1378, %v1375
    %v1382 = vpack.c.bf16 %v1379, %v1376
    %1386 = vrot.lane.b32.xlu0 %v1380, 112
    %v1387 = vpop.permute.xlu0 %1386
    %1388 = vrot.lane.b32.xlu0 %v1381, 112
    %v1389 = vpop.permute.xlu0 %1388
    %1390 = vrot.lane.b32.xlu0 %v1382, 112
    %v1391 = vpop.permute.xlu0 %1390
    %v1392 = vsel %vm452, %v1387, %v1389
    %v1393 = vsel %vm452, %v1389, %v1391
    %1396 = vst [vmem:[#allocation3 + $0xf0] sm:$0xff] %v1392
    %1397 = vst [vmem:[#allocation3 + $0xf8] sm:$0xff] %v1393
    %v1398 = vld [vmem:[#allocation2 + $0x28] sm:$0xff]
    %v1399 = vld [vmem:[#allocation2 + $0x30] sm:$0xff]
    %v1400 = vld [vmem:[#allocation2 + $0x38] sm:$0xff]
    %v1401 = vld [vmem:[#allocation2 + $0x68] sm:$0xff]
    %v1402 = vld [vmem:[#allocation2 + $0x70] sm:$0xff]
    %v1403 = vld [vmem:[#allocation2 + $0x78] sm:$0xff]
    %v1404 = vmul.f32 %v1398, %v475
    %v1405 = vmul.f32 %v1399, %v479
    %v1406 = vmul.f32 %v1400, %v477
    %v1407 = vmul.f32 %v1401, %v475
    %v1408 = vmul.f32 %v1402, %v479
    %v1409 = vmul.f32 %v1403, %v477
    %v1410 = vpack.c.bf16 %v1407, %v1404
    %v1411 = vpack.c.bf16 %v1408, %v1405
    %v1412 = vpack.c.bf16 %v1409, %v1406
    %1416 = vrot.lane.b32.xlu0 %v1410, 111
    %v1417 = vpop.permute.xlu0 %1416
    %1418 = vrot.lane.b32.xlu0 %v1411, 111
    %v1419 = vpop.permute.xlu0 %1418
    %1420 = vrot.lane.b32.xlu0 %v1412, 111
    %v1421 = vpop.permute.xlu0 %1420
    %v1422 = vsel %vm501, %v1417, %v1419
    %v1423 = vsel %vm501, %v1419, %v1421
    %1426 = vst [vmem:[#allocation3 + $0x110] sm:$0xff] %v1422
    %1427 = vst [vmem:[#allocation3 + $0x118] sm:$0xff] %v1423
    %v1428 = vld [vmem:[%s4] sm:$0xff]
    %v1429 = vld [vmem:[%s4 + $0x8] sm:$0xff]
    %v1430 = vld [vmem:[#allocation3] sm:$0xff]
    %v1431 = vld [vmem:[#allocation3 + $0x8] sm:$0xff]
    %v1432 = vld [vmem:[#allocation3 + $0x10] sm:$0xff]
    %v1433 = vld [vmem:[#allocation3 + $0x18] sm:$0xff]
    %v1434 = vld [vmem:[#allocation3 + $0x20] sm:$0xff]
    %v1435 = vld [vmem:[#allocation3 + $0x28] sm:$0xff]
    %v1436 = vld [vmem:[#allocation3 + $0x30] sm:$0xff]
    %v1437 = vld [vmem:[#allocation3 + $0x38] sm:$0xff]
    %v1438 = vld [vmem:[#allocation3 + $0x40] sm:$0xff]
    %v1439 = vld [vmem:[#allocation3 + $0x48] sm:$0xff]
    %v1440 = vld [vmem:[#allocation3 + $0x50] sm:$0xff]
    %v1441 = vld [vmem:[#allocation3 + $0x58] sm:$0xff]
    %v1442 = vld [vmem:[#allocation3 + $0x60] sm:$0xff]
    %v1443 = vld [vmem:[#allocation3 + $0x68] sm:$0xff]
    %v1444 = vld [vmem:[#allocation3 + $0x70] sm:$0xff]
    %v1445 = vld [vmem:[#allocation3 + $0x78] sm:$0xff]
    %v1446 = vld [vmem:[#allocation3 + $0x80] sm:$0xff]
    %v1447 = vld [vmem:[#allocation3 + $0x88] sm:$0xff]
    %v1448 = vld [vmem:[#allocation3 + $0x90] sm:$0xff]
    %v1449 = vld [vmem:[#allocation3 + $0x98] sm:$0xff]
    %v1450 = vld [vmem:[#allocation3 + $0xa0] sm:$0xff]
    %v1451 = vld [vmem:[#allocation3 + $0xa8] sm:$0xff]
    %v1452 = vld [vmem:[#allocation3 + $0xb0] sm:$0xff]
    %v1453 = vld [vmem:[#allocation3 + $0xb8] sm:$0xff]
    %v1454 = vld [vmem:[#allocation3 + $0xc0] sm:$0xff]
    %v1455 = vld [vmem:[#allocation3 + $0xc8] sm:$0xff]
    %v1456 = vld [vmem:[#allocation3 + $0xd0] sm:$0xff]
    %v1457 = vld [vmem:[#allocation3 + $0xd8] sm:$0xff]
    %v1458 = vld [vmem:[#allocation3 + $0xe0] sm:$0xff]
    %v1459 = vld [vmem:[#allocation3 + $0xe8] sm:$0xff]
    %v1460 = vld [vmem:[#allocation3 + $0xf0] sm:$0xff]
    %v1461 = vld [vmem:[#allocation3 + $0xf8] sm:$0xff]
    %v1462 = vld [vmem:[#allocation3 + $0x100] sm:$0xff]
    %v1463 = vld [vmem:[#allocation3 + $0x108] sm:$0xff]
    %v1464 = vld [vmem:[#allocation3 + $0x110] sm:$0xff]
    %v1465 = vld [vmem:[#allocation3 + $0x118] sm:$0xff]
    %v1466 = vld [vmem:[%s5] sm:$0xff]
    %v1467 = vld [vmem:[%s5 + $0x8] sm:$0xff]
    %1469 = vset.pattern.permute.xlu0 0
    %1470 = vperm.xlu0 %1469, %v1466
    %v1471 = vpop.permute.xlu0 %1470
    %1474 = vset.pattern.permute.xlu0 0
    %1475 = vperm.xlu0 %1474, %v1467
    %v1476 = vpop.permute.xlu0 %1475
    %v1480 = vunpack.c.l.b16 %v1428
    %v1481 = vunpack.c.h.b16 %v1428
    %v1482 = vunpack.c.l.b16 %v1429
    %v1483 = vunpack.c.h.b16 %v1429
    %v1484 = vpack.c.b16 %v1482, %v1480
    %v1485 = vpack.c.b16 %v1483, %v1481
    %v1488 = vsel %vm429, %v1485, 0
    %1490 = vmatprep.subr.bf16.mxu0 %v1431
    %1491 = vmatpush1.bf16.msra.mxu0 %v1430
    %1492 = vmatprep.subr.bf16.mxu0 %v1435
    %1493 = vmatpush1.bf16.msra.mxu0 %v1434
    %1494 = vmatprep.subr.bf16.mxu0 %v1439
    %1495 = vmatpush1.bf16.msra.mxu0 %v1438
    %1496 = vmatprep.subr.bf16.mxu0 %v1443
    %1497 = vmatpush1.bf16.msra.mxu0 %v1442
    %1498 = vmatprep.subr.bf16.mxu0 %v1447
    %1499 = vmatpush1.bf16.msra.mxu0 %v1446
    %1500 = vmatprep.subr.bf16.mxu0 %v1451
    %1501 = vmatpush1.bf16.msra.mxu0 %v1450
    %1502 = vmatprep.subr.bf16.mxu0 %v1455
    %1503 = vmatpush1.bf16.msra.mxu0 %v1454
    %1504 = vmatprep.subr.bf16.mxu0 %v1459
    %1505 = vmatpush1.bf16.msra.mxu0 %v1458
    %1506 = vmatprep.subr.bf16.mxu0 %v1463
    %1507 = vmatpush1.bf16.msra.mxu0 %v1462
    %1508 = vmatprep.subr.bf16.mxu0 0
    %1509 = vmatpush1.bf16.msra.mxu0 0
    %1510 = vmatprep.subr.bf16.mxu0 0
    %1511 = vmatpush1.bf16.msra.mxu0 0
    %1512 = vmatprep.subr.bf16.mxu0 0
    %1513 = vmatpush1.bf16.msra.mxu0 0
    %1514 = vmatprep.subr.bf16.mxu0 0
    %1515 = vmatpush1.bf16.msra.mxu0 0
    %1516 = vmatprep.subr.bf16.mxu0 0
    %1517 = vmatpush1.bf16.msra.mxu0 0
    %1518 = vmatprep.subr.bf16.mxu0 0
    %1519 = vmatpush1.bf16.msra.mxu0 0
    %1520 = vmatprep.subr.bf16.mxu0 0
    %1521 = vmatpush1.bf16.msra.mxu0 0
    %1522 = vmatprep.mubr.bf16.mxu0 %v1488
    %1523 = vmatmul.mubr.bf16.gmra.mrb[0].mxu0 %v1484
    %v1524 = vpop.f32.mrb[0].mxu0
    %v1525 = vadd.f32 %v1471, %v1524
    %v1526 = vpop.f32.mrb[0].mxu0
    %v1527 = vadd.f32 %v1471, %v1526
    %v1528 = vpop.f32.mrb[0].mxu0
    %v1529 = vadd.f32 %v1476, %v1528
    %v1530 = vpop.f32.mrb[0].mxu0
    %v1531 = vadd.f32 %v1476, %v1530
    %1532 = vdwg.mxu0
    %1533 = vmatprep.subr.bf16.mxu0 %v1433
    %1534 = vmatpush1.bf16.msra.mxu0 %v1432
    %1535 = vmatprep.subr.bf16.mxu0 %v1437
    %1536 = vmatpush1.bf16.msra.mxu0 %v1436
    %1537 = vmatprep.subr.bf16.mxu0 %v1441
    %1538 = vmatpush1.bf16.msra.mxu0 %v1440
    %1539 = vmatprep.subr.bf16.mxu0 %v1445
    %1540 = vmatpush1.bf16.msra.mxu0 %v1444
    %1541 = vmatprep.subr.bf16.mxu0 %v1449
    %1542 = vmatpush1.bf16.msra.mxu0 %v1448
    %1543 = vmatprep.subr.bf16.mxu0 %v1453
    %1544 = vmatpush1.bf16.msra.mxu0 %v1452
    %1545 = vmatprep.subr.bf16.mxu0 %v1457
    %1546 = vmatpush1.bf16.msra.mxu0 %v1456
    %1547 = vmatprep.subr.bf16.mxu0 %v1461
    %1548 = vmatpush1.bf16.msra.mxu0 %v1460
    %1549 = vmatprep.subr.bf16.mxu0 %v1465
    %1550 = vmatpush1.bf16.msra.mxu0 %v1464
    %1551 = vmatprep.subr.bf16.mxu0 0
    %1552 = vmatpush1.bf16.msra.mxu0 0
    %1553 = vmatprep.subr.bf16.mxu0 0
    %1554 = vmatpush1.bf16.msra.mxu0 0
    %1555 = vmatprep.subr.bf16.mxu0 0
    %1556 = vmatpush1.bf16.msra.mxu0 0
    %1557 = vmatprep.subr.bf16.mxu0 0
    %1558 = vmatpush1.bf16.msra.mxu0 0
    %1559 = vmatprep.subr.bf16.mxu0 0
    %1560 = vmatpush1.bf16.msra.mxu0 0
    %1561 = vmatprep.subr.bf16.mxu0 0
    %1562 = vmatpush1.bf16.msra.mxu0 0
    %1563 = vmatprep.subr.bf16.mxu0 0
    %1564 = vmatpush1.bf16.msra.mxu0 0
    %1565 = vmatprep.mubr.bf16.mxu0 %v1488
    %1566 = vmatmul.mubr.bf16.gmra.mrb[0].mxu0 %v1484
    %v1567 = vpop.f32.mrb[0].mxu0
    %v1568 = vadd.f32 %v1471, %v1567
    %v1569 = vpop.f32.mrb[0].mxu0
    %v1570 = vadd.f32 %v1471, %v1569
    %v1571 = vpop.f32.mrb[0].mxu0
    %v1572 = vadd.f32 %v1476, %v1571
    %v1573 = vpop.f32.mrb[0].mxu0
    %v1574 = vadd.f32 %v1476, %v1573
    %1575 = vdwg.mxu0
    %v1576 = vadd.f32 %v1525, %v1527
    %1577 = vadd.xlane.f32.xlu0 %v1576
    %v1578 = vpop.xlane.xlu0 %1577
    %v1579 = vadd.f32 %v1529, %v1531
    %1580 = vadd.xlane.f32.xlu0 %v1579
    %v1581 = vpop.xlane.xlu0 %1580
    %v1582 = vmul.f32 %v1578, 0.00390625
    %v1583 = vmul.f32 %v1581, 0.00390625
    %v1584 = vld [vmem:[%s6] sm:$0xff]
    %v1585 = vld [vmem:[%s6 + $0x8] sm:$0xff]
    %v1586 = vmul.f32 %v1584, %v1582
    %v1587 = vmul.f32 %v1585, %v1583
    %vm1588 = vcmask 31744
    %v1589 = vsel %vm1588, %v1586, 0.0
    %v1590 = vsel %vm1588, %v1587, 0.0
    %v1591 = vadd.f32 %v1589, %v1590
    %v1592 = vrot.slane %v1591, 4
    %v1593 = vadd.f32 %v1591, %v1592
    %v1594 = vrot.slane %v1593, 2
    %v1595 = vadd.f32 %v1593, %v1594
    %v1596 = vrot.slane %v1595, 1
    %v1597 = vadd.f32 %v1595, %v1596
    %v1598 = vld [vmem:[%s7] sm:$0x1]
    %v1599 = vadd.f32 %v1597, %v1598
    %v1600 = vmax.f32 %v1599, 0.0
    %v1601 = vld [vmem:[%s8] sm:$0xff]
    %v1602 = vld [vmem:[%s8 + $0x8] sm:$0xff]
    %v1603 = vlaneseq
    %v1604 = vshrl.u32 %v1603, 7
    %v1605 = vsub.s32 0, %v1604
    %v1606 = vrot.slane %v1600, %v1605
    %v1607 = vmul.f32 %v1601, %v1606
    %v1608 = vmul.f32 %v1602, %v1606
    %v1609 = vsel %vm1588, %v1607, 0.0
    %1610 = vadd.xlane.f32.xlu0 %v1609
    %v1611 = vpop.xlane.xlu0 %1610
    %v1612 = vsel %vm1588, %v1608, 0.0
    %1613 = vadd.xlane.f32.xlu0 %v1612
    %v1614 = vpop.xlane.xlu0 %1613
    %v1615 = vld [vmem:[%s9] sm:$0xff]
    %v1616 = vld [vmem:[%s9 + $0x8] sm:$0xff]
    %v1617 = vadd.f32 %v1611, %v1615
    %v1618 = vadd.f32 %v1614, %v1616
    %v1619 = vxor.u32 %v1617, 2147483648
    %v1620 = vxor.u32 %v1618, 2147483648
    %v1621 = vmul.f32 %v1619, 1.442695
    %v1622 = vpow.pop %v1621
    %v1623 = vmul.f32 %v1620, 1.442695
    %v1624 = vpow.pop %v1623
    %v1625 = vadd.f32 %v1622, 1.0
    %v1626 = vadd.f32 %v1624, 1.0
    %v1627 = vrcp.pop %v1625
    %v1628 = vmul.f32 1.0, %v1627
    %v1629 = vrcp.pop %v1626
    %v1630 = vmul.f32 1.0, %v1629
    %1632 = vset.pattern.permute.xlu0 0
    %1633 = vperm.xlu0 %1632, %v1628
    %v1634 = vpop.permute.xlu0 %1633
    %1637 = vset.pattern.permute.xlu0 0
    %1638 = vperm.xlu0 %1637, %v1630
    %v1639 = vpop.permute.xlu0 %1638
    %v1641 = vmul.f32 %v1525, %v1634
    %v1642 = vmul.f32 %v1527, %v1634
    %v1643 = vmul.f32 %v1529, %v1639
    %v1644 = vmul.f32 %v1531, %v1639
    %v1645 = vadd.f32 %v1641, %v76
    %v1646 = vadd.f32 %v1642, %v77
    %v1647 = vadd.f32 %v1643, %v78
    %v1648 = vadd.f32 %v1644, %v79
    %1649 = vst [vmem:[#allocation7] sm:$0xff] %v1645
    %1650 = vst [vmem:[#allocation7 + $0x8] sm:$0xff] %v1646
    %1651 = vst [vmem:[#allocation7 + $0x10] sm:$0xff] %v1647
    %1652 = vst [vmem:[#allocation7 + $0x18] sm:$0xff] %v1648
    %v1653 = vadd.f32 %v1568, %v1570
    %1654 = vadd.xlane.f32.xlu0 %v1653
    %v1655 = vpop.xlane.xlu0 %1654
    %v1656 = vadd.f32 %v1572, %v1574
    %1657 = vadd.xlane.f32.xlu0 %v1656
    %v1658 = vpop.xlane.xlu0 %1657
    %v1659 = vmul.f32 %v1655, 0.00390625
    %v1660 = vmul.f32 %v1658, 0.00390625
    %v1661 = vld [vmem:[%s6] sm:$0xff]
    %v1662 = vld [vmem:[%s6 + $0x8] sm:$0xff]
    %v1663 = vmul.f32 %v1661, %v1659
    %v1664 = vmul.f32 %v1662, %v1660
    %v1665 = vsel %vm1588, %v1663, 0.0
    %v1666 = vsel %vm1588, %v1664, 0.0
    %v1667 = vadd.f32 %v1665, %v1666
    %v1668 = vrot.slane %v1667, 4
    %v1669 = vadd.f32 %v1667, %v1668
    %v1670 = vrot.slane %v1669, 2
    %v1671 = vadd.f32 %v1669, %v1670
    %v1672 = vrot.slane %v1671, 1
    %v1673 = vadd.f32 %v1671, %v1672
    %v1674 = vld [vmem:[%s7] sm:$0x1]
    %v1675 = vadd.f32 %v1673, %v1674
    %v1676 = vmax.f32 %v1675, 0.0
    %v1677 = vld [vmem:[%s8] sm:$0xff]
    %v1678 = vld [vmem:[%s8 + $0x8] sm:$0xff]
    %v1679 = vlaneseq
    %v1680 = vshrl.u32 %v1679, 7
    %v1681 = vsub.s32 0, %v1680
    %v1682 = vrot.slane %v1676, %v1681
    %v1683 = vmul.f32 %v1677, %v1682
    %v1684 = vmul.f32 %v1678, %v1682
    %v1685 = vsel %vm1588, %v1683, 0.0
    %1686 = vadd.xlane.f32.xlu0 %v1685
    %v1687 = vpop.xlane.xlu0 %1686
    %v1688 = vsel %vm1588, %v1684, 0.0
    %1689 = vadd.xlane.f32.xlu0 %v1688
    %v1690 = vpop.xlane.xlu0 %1689
    %v1691 = vld [vmem:[%s9] sm:$0xff]
    %v1692 = vld [vmem:[%s9 + $0x8] sm:$0xff]
    %v1693 = vadd.f32 %v1687, %v1691
    %v1694 = vadd.f32 %v1690, %v1692
    %v1695 = vxor.u32 %v1693, 2147483648
    %v1696 = vxor.u32 %v1694, 2147483648
    %v1697 = vmul.f32 %v1695, 1.442695
    %v1698 = vpow.pop %v1697
    %v1699 = vmul.f32 %v1696, 1.442695
    %v1700 = vpow.pop %v1699
    %v1701 = vadd.f32 %v1698, 1.0
    %v1702 = vadd.f32 %v1700, 1.0
    %v1703 = vrcp.pop %v1701
    %v1704 = vmul.f32 1.0, %v1703
    %v1705 = vrcp.pop %v1702
    %v1706 = vmul.f32 1.0, %v1705
    %1708 = vset.pattern.permute.xlu0 0
    %1709 = vperm.xlu0 %1708, %v1704
    %v1710 = vpop.permute.xlu0 %1709
    %1713 = vset.pattern.permute.xlu0 0
    %1714 = vperm.xlu0 %1713, %v1706
    %v1715 = vpop.permute.xlu0 %1714
    %v1717 = vmul.f32 %v1568, %v1710
    %v1718 = vmul.f32 %v1570, %v1710
    %v1719 = vmul.f32 %v1572, %v1715
    %v1720 = vmul.f32 %v1574, %v1715
    %v1721 = vadd.f32 %v1717, %v81
    %v1722 = vadd.f32 %v1718, %v82
    %v1723 = vadd.f32 %v1719, %v83
    %v1724 = vadd.f32 %v1720, %v84
    %s1725 = scalar_lea.vmem [#allocation7], 32
    %1726 = vst [vmem:[%s1725] sm:$0xff] %v1721
    %1727 = vst [vmem:[%s1725 + $0x8] sm:$0xff] %v1722
    %1728 = vst [vmem:[%s1725 + $0x10] sm:$0xff] %v1723
    %1729 = vst [vmem:[%s1725 + $0x18] sm:$0xff] %v1724
    // Predicated region
    $region46: #{tpu_custom_call.1} parent=1 // pred_check
      _
    $region47: #{tpu_custom_call.1} parent=1 // pred_check_branch
      %1731 = sbr.rel (0) target = $region49
    $region48: #{tpu_custom_call.1} parent=1 // pred_region
      %s1733 = ssub.s32 1024, 1024
      %1734 = vsyncadd [#allocation6], %s1733
      %s1735 = sshll.u32 [#allocation7], 4
      %s1736 = int_to_ptr.vmem [resolvable:$true] %s1735
      %1741 = dma.vmem_to_hbm [thread:$0]  %s1736, 1024, %s10, [#allocation6], 256, 256, 16
    $region49: #{tpu_custom_call.1} parent=1 // pred_fallthru
      _
    // Predicated region
    $region50: #{tpu_custom_call.1} parent=1 // pred_check
      _
    $region51: #{tpu_custom_call.1} parent=1 // pred_check_branch
      %1743 = sbr.rel (0) target = $region53
    $region52: #{tpu_custom_call.1} parent=1 // pred_region
      %1744 = dma.done [#allocation6], 1024
    $region53: #{tpu_custom_call.1} parent=1 // pred_fallthru
      _
    %1745 = vsyncpa [#allocation5], 1
    %1746 = vsyncpa [#allocation6], 1

</llo_original>
